<compile_context>
chip_gen: v5e
topology: v5e:2x2
jax: 0.10.0
libtpu: 0.0.40
codegen_flags: <defaults>
</compile_context>

<pallas_src>
import functools

import jax
import jax.numpy as jnp
from jax import lax
from jax.experimental import pallas as pl
from jax.experimental.pallas import tpu as pltpu

EPS = 1e-5

# bf16 matmul operands: 2-4x MXU throughput and half the operand bytes on
# v5e/v6e/v7x.  All accumulation / BN / ReLU math stays f32.  Flip to
# jnp.float32 for a tight (5e-4) match with the f32 PyTorch reference.
MATMUL_DTYPE = jnp.bfloat16


def _round_up(x, m):
    return (x + m - 1) // m * m


def _batch_stat_row(v):
    """Per-channel [sum, sum_sq] of v:(R, CP) as ONE ones-row MXU matmul -> (1, 2*CP)."""
    r = v.shape[0]
    ones_row = jnp.ones((1, r), jnp.float32)
    return jnp.dot(ones_row, jnp.concatenate([v, v * v], axis=1),
                   preferred_element_type=jnp.float32)


# --------------------------- pass 1: conv1 + BN1 stats ---------------------------
def _conv1_stats_kernel(xp_ref, w1_ref, y1_ref, s1_ref, *, H, W):
    """xp_ref: (1, H+2, W+2, Cin) f32 (spatially padded raw input block)
       w1_ref: (K1P, CP) bf16 im2col conv1 weights (K zero-padded)
       y1_ref: (1, H, W, CP) f32 conv1 output block
       s1_ref: (1, 2*CP) f32 [sum, sumsq] accumulator (grid-resident)."""
    Cin = xp_ref.shape[-1]
    K1 = 9 * Cin
    K1P, CP = w1_ref.shape
    R = H * W

    xp = xp_ref[...]                                   # (1, H+2, W+2, Cin)
    taps = [xp[0, kh:kh + H, kw:kw + W, :].reshape(R, Cin)
            for kh in range(3) for kw in range(3)]
    if K1P > K1:                                       # lane-pad K to match w1m
        taps.append(jnp.zeros((R, K1P - K1), xp.dtype))
    p1 = jnp.concatenate(taps, axis=1).astype(w1_ref.dtype)   # (R, K1P)

    # Bias b1 omitted on purpose: cancelled exactly by BN1's mean subtraction.
    y1 = jnp.dot(p1, w1_ref[...], preferred_element_type=jnp.float32)  # (R, CP)
    y1_ref[...] = y1.reshape(1, H, W, CP)

    @pl.when(pl.program_id(0) == 0)
    def _init():
        s1_ref[...] = jnp.zeros_like(s1_ref)
    s1_ref[...] += _batch_stat_row(y1)


# ------------- pass 2: BN1+ReLU, conv2 (per-kh-row dots), residual, BN2 stats -------------
def _bn1_conv2_stats_kernel(y1_ref, sc1_ref, sh1_ref, w2_ref, z_ref, s2_ref,
                            x1p_ref, *, H, W):
    """y1_ref : (1, H, W, CP) f32       sc1/sh1: (1, CP) f32 folded BN1 scale/shift
       w2_ref : (3, 3*CP, CP) bf16      (per-kh-row im2col layout)
       z_ref  : (1, H, W, CP) f32       pre-BN2 residual sum
       s2_ref : (1, 2*CP) f32           [sum, sumsq] accumulator
       x1p_ref: (H+2, W+2, CP) bf16     zero-halo scratch staging x1."""
    CP = sc1_ref.shape[-1]
    R = H * W

    y1 = y1_ref[...].reshape(R, CP)
    x1 = jnp.maximum(y1 * sc1_ref[...] + sh1_ref[...], 0.0)        # BN1 + ReLU, f32

    # Zero ONLY the 1-px halo, and only once (scratch persists; grid is "arbitrary"
    # so it runs sequentially on one core).  Interior is overwritten every step.
    @pl.when(pl.program_id(0) == 0)
    def _zero_halo():
        x1p_ref[0:1, :, :] = jnp.zeros((1, W + 2, CP), x1p_ref.dtype)
        x1p_ref[H + 1:H + 2, :, :] = jnp.zeros((1, W + 2, CP), x1p_ref.dtype)
        x1p_ref[:, 0:1, :] = jnp.zeros((H + 2, 1, CP), x1p_ref.dtype)
        x1p_ref[:, W + 1:W + 2, :] = jnp.zeros((H + 2, 1, CP), x1p_ref.dtype)

    x1p_ref[1:H + 1, 1:W + 1, :] = x1.astype(x1p_ref.dtype).reshape(H, W, CP)

    # conv2: accumulate one dot per kh row (K = 3*CP), accumulator starts at the
    # residual x1 so z = conv2(x1) + x1 with no extra add.  Bias b2 omitted
    # (cancelled by BN2's mean subtraction).
    acc = x1
    for kh in range(3):
        prow = jnp.concatenate(
            [x1p_ref[kh:kh + H, kw:kw + W, :].reshape(R, CP) for kw in range(3)],
            axis=1)                                                 # (R, 3*CP) bf16
        acc = acc + jnp.dot(prow, w2_ref[kh], preferred_element_type=jnp.float32)

    z_ref[...] = acc.reshape(1, H, W, CP)

    @pl.when(pl.program_id(0) == 0)
    def _init():
        s2_ref[...] = jnp.zeros_like(s2_ref)
    s2_ref[...] += _batch_stat_row(acc)


# --------------------------- pass 3: BN2 + ReLU epilogue ---------------------------
def _bn2_relu_kernel(z_ref, sc2_ref, sh2_ref, out_ref, *, Cout):
    y = jnp.maximum(z_ref[...] * sc2_ref[...] + sh2_ref[...], 0.0)
    out_ref[...] = y[:, :, :, :Cout]        # write only the real channels


# ----------------------------------- wrapper -----------------------------------
def conv_block_forward(x_nchw, params):
    """params: w1 (3,3,Cin,Cout), b1, g1, be1, w2 (3,3,Cout,Cout), b2, g2, be2.
    Conv biases b1/b2 are accepted but unused (training-mode BN cancels them)."""
    w1, g1, be1 = params["w1"], params["g1"], params["be1"]
    w2, g2, be2 = params["w2"], params["g2"], params["be2"]

    x = jnp.transpose(x_nchw, (0, 2, 3, 1)).astype(jnp.float32)   # NCHW -> NHWC
    N, H, W, Cin = x.shape
    Cout = w1.shape[-1]
    CP = _round_up(Cout, 128)          # lane-dense channel count inside the kernels
    K1 = 9 * Cin
    K1P = _round_up(K1, 128)
    R_total = N * H * W

    # Raw input with a 1-px spatial halo (~x bytes of HBM); im2col duplication
    # happens in VMEM inside kernel 1.
    xpad = jnp.pad(x, ((0, 0), (1, 1), (1, 1), (0, 0)))

    w1m = jnp.pad(w1.astype(jnp.float32).reshape(K1, Cout),
                  ((0, K1P - K1), (0, CP - Cout))).astype(MATMUL_DTYPE)
    w2m = jnp.pad(w2.astype(jnp.float32),
                  ((0, 0), (0, 0), (0, CP - Cout), (0, CP - Cout))
                  ).reshape(3, 3 * CP, CP).astype(MATMUL_DTYPE)
    # gamma/beta MUST stay zero-padded: padded channels then get scale=0, shift=0,
    # so nothing leaks through the padded lanes into conv2 or the output.
    padv = lambda v: jnp.pad(v.astype(jnp.float32).reshape(-1), (0, CP - Cout))
    g1p, be1p, g2p, be2p = padv(g1), padv(be1), padv(g2), padv(be2)

    arb = pltpu.CompilerParams(dimension_semantics=("arbitrary",))

    # ---- pass 1: conv1 + BN1 batch-stat accumulation (grid over N) ----
    y1, s1 = pl.pallas_call(
        functools.partial(_conv1_stats_kernel, H=H, W=W),
        grid=(N,),
        in_specs=[
            pl.BlockSpec((1, H + 2, W + 2, Cin), lambda n: (n, 0, 0, 0)),
            pl.BlockSpec((K1P, CP), lambda n: (0, 0)),
        ],
        out_specs=[
            pl.BlockSpec((1, H, W, CP), lambda n: (n, 0, 0, 0)),
            pl.BlockSpec((1, 2 * CP), lambda n: (0, 0)),
        ],
        out_shape=(jax.ShapeDtypeStruct((N, H, W, CP), jnp.float32),
                   jax.ShapeDtypeStruct((1, 2 * CP), jnp.float32)),
        compiler_params=arb,
    )(xpad, w1m)

    def fold_bn(stats, g, be):
        mean = stats[0, :CP] / R_total
        var = jnp.maximum(stats[0, CP:] / R_total - mean * mean, 0.0)
        scale = g * lax.rsqrt(var + EPS)
        shift = be - mean * scale
        return scale.reshape(1, CP), shift.reshape(1, CP)

    sc1, sh1 = fold_bn(s1, g1p, be1p)

    # ---- pass 2: BN1+ReLU -> conv2 (accumulating) + residual + BN2 stats ----
    z, s2 = pl.pallas_call(
        functools.partial(_bn1_conv2_stats_kernel, H=H, W=W),
        grid=(N,),
        in_specs=[
            pl.BlockSpec((1, H, W, CP), lambda n: (n, 0, 0, 0)),
            pl.BlockSpec((1, CP), lambda n: (0, 0)),
            pl.BlockSpec((1, CP), lambda n: (0, 0)),
            pl.BlockSpec((3, 3 * CP, CP), lambda n: (0, 0, 0)),
        ],
        out_specs=[
            pl.BlockSpec((1, H, W, CP), lambda n: (n, 0, 0, 0)),
            pl.BlockSpec((1, 2 * CP), lambda n: (0, 0)),
        ],
        out_shape=(jax.ShapeDtypeStruct((N, H, W, CP), jnp.float32),
                   jax.ShapeDtypeStruct((1, 2 * CP), jnp.float32)),
        scratch_shapes=[pltpu.VMEM((H + 2, W + 2, CP), MATMUL_DTYPE)],
        compiler_params=arb,
    )(y1, sc1, sh1, w2m)

    sc2, sh2 = fold_bn(s2, g2p, be2p)

    # ---- pass 3: BN2 + ReLU, lane-trimmed NHWC output ----
    out_nhwc = pl.pallas_call(
        functools.partial(_bn2_relu_kernel, Cout=Cout),
        grid=(N,),
        in_specs=[
            pl.BlockSpec((1, H, W, CP), lambda n: (n, 0, 0, 0)),
            pl.BlockSpec((1, CP), lambda n: (0, 0)),
            pl.BlockSpec((1, CP), lambda n: (0, 0)),
        ],
        out_specs=pl.BlockSpec((1, H, W, Cout), lambda n: (n, 0, 0, 0)),
        out_shape=jax.ShapeDtypeStruct((N, H, W, Cout), jnp.float32),
        compiler_params=pltpu.CompilerParams(dimension_semantics=("parallel",)),
    )(z, sc2, sh2)

    return jnp.transpose(out_nhwc, (0, 3, 1, 2))        # NHWC -> NCHW


# ------------------------- pure-JAX reference -------------------------
def _bn_relu_ref(y_nhwc, gamma, beta):
    m = jnp.mean(y_nhwc, axis=(0, 1, 2), keepdims=True)
    v = jnp.mean((y_nhwc - m) ** 2, axis=(0, 1, 2), keepdims=True)
    return jnp.maximum((y_nhwc - m) * lax.rsqrt(v + EPS) * gamma + beta, 0.0)


def conv_block_ref(x_nchw, params):
    x = jnp.transpose(x_nchw, (0, 2, 3, 1)).astype(jnp.float32)
    dn = ("NHWC", "HWIO", "NHWC")
    y1 = lax.conv_general_dilated(x, params["w1"], (1, 1), ((1, 1), (1, 1)),
                                  dimension_numbers=dn) + params["b1"]
    x1 = _bn_relu_ref(y1, params["g1"], params["be1"])
    y2 = lax.conv_general_dilated(x1, params["w2"], (1, 1), ((1, 1), (1, 1)),
                                  dimension_numbers=dn) + params["b2"]
    out = _bn_relu_ref(y2 + x1, params["g2"], params["be2"])
    return jnp.transpose(out, (0, 3, 1, 2))


if __name__ == "__main__":
    N, Cin, Cout, H, W = 2, 4, 8, 16, 16

    key = jax.random.PRNGKey(0)
    kx, kw1, kb1, kw2, kb2 = jax.random.split(key, 5)

    x = jax.random.normal(kx, (N, Cin, H, W), jnp.float32)

    params = {
        # conv weights stored HWIO (kh, kw, cin, cout); equals torch weight.transpose(2,3,1,0)
        "w1": 0.1 * jax.random.normal(kw1, (3, 3, Cin, Cout), jnp.float32),
        "b1": 0.05 * jax.random.normal(kb1, (Cout,), jnp.float32),
        "g1": jnp.ones((Cout,), jnp.float32),   # BatchNorm2d default affine init
        "be1": jnp.zeros((Cout,), jnp.float32),
        "w2": 0.1 * jax.random.normal(kw2, (3, 3, Cout, Cout), jnp.float32),
        "b2": 0.05 * jax.random.normal(kb2, (Cout,), jnp.float32),
        "g2": jnp.ones((Cout,), jnp.float32),
        "be2": jnp.zeros((Cout,), jnp.float32),
    }

    out = jax.block_until_ready(conv_block_forward(x, params))
    ref = jax.block_until_ready(conv_block_ref(x, params))

    assert out.shape == (N, Cout, H, W)
    # bf16 matmul operands => ~1e-2-level quantization error vs the f32 reference
    # (BN amplifies it by 1/std); with MATMUL_DTYPE = f32 this tightens to ~5e-4.
    tol = 5e-2 if MATMUL_DTYPE == jnp.bfloat16 else 5e-4
    err = float(jnp.max(jnp.abs(out - ref)))
    assert jnp.allclose(out, ref, atol=tol, rtol=tol), err
    print("KERNEL_OK")
</pallas_src>

<mosaic_0001>
module attributes {stable_mosaic.version = 11 : i64} {
  func.func @_conv1_stats_kernel(%arg0: i32, %arg1: memref<1x18x18x4xf32, #tpu.memory_space<vmem>>, %arg2: memref<128x128xbf16, #tpu.memory_space<vmem>>, %arg3: memref<1x16x16x128xf32, #tpu.memory_space<vmem>>, %arg4: memref<1x256xf32, #tpu.memory_space<vmem>>) attributes {dimension_semantics = [#tpu.dimension_semantics<arbitrary>], iteration_bounds = array<i64: 2>, scalar_prefetch = 0 : i64, scratch_operands = 0 : i64, tpu.core_type = #tpu.core_type<tc>, window_params = [{transform_indices = @transform_0, window_bounds = array<i64: 1, 18, 18, 4>}, {pipeline_mode = #tpu.pipeline_mode<synchronous>, transform_indices = @transform_1, window_bounds = array<i64: 128, 128>}, {transform_indices = @transform_2, window_bounds = array<i64: 1, 16, 16, 128>}, {pipeline_mode = #tpu.pipeline_mode<synchronous>, transform_indices = @transform_3, window_bounds = array<i64: 1, 256>}]} {
    %c0 = arith.constant 0 : index
    %c0_0 = arith.constant 0 : index
    %c0_1 = arith.constant 0 : index
    %c0_2 = arith.constant 0 : index
    %0 = vector.load %arg1[%c0, %c0_0, %c0_1, %c0_2] : memref<1x18x18x4xf32, #tpu.memory_space<vmem>>, vector<1x18x18x4xf32>
    %1 = vector.extract_strided_slice %0 {offsets = [0, 0, 0, 0], sizes = [1, 16, 16, 4], strides = [1, 1, 1, 1]} : vector<1x18x18x4xf32> to vector<1x16x16x4xf32>
    %2 = vector.shape_cast %1 : vector<1x16x16x4xf32> to vector<16x16x4xf32>
    %3 = vector.shape_cast %2 : vector<16x16x4xf32> to vector<256x4xf32>
    %4 = vector.extract_strided_slice %0 {offsets = [0, 0, 1, 0], sizes = [1, 16, 16, 4], strides = [1, 1, 1, 1]} : vector<1x18x18x4xf32> to vector<1x16x16x4xf32>
    %5 = vector.shape_cast %4 : vector<1x16x16x4xf32> to vector<16x16x4xf32>
    %6 = vector.shape_cast %5 : vector<16x16x4xf32> to vector<256x4xf32>
    %7 = vector.extract_strided_slice %0 {offsets = [0, 0, 2, 0], sizes = [1, 16, 16, 4], strides = [1, 1, 1, 1]} : vector<1x18x18x4xf32> to vector<1x16x16x4xf32>
    %8 = vector.shape_cast %7 : vector<1x16x16x4xf32> to vector<16x16x4xf32>
    %9 = vector.shape_cast %8 : vector<16x16x4xf32> to vector<256x4xf32>
    %10 = vector.extract_strided_slice %0 {offsets = [0, 1, 0, 0], sizes = [1, 16, 16, 4], strides = [1, 1, 1, 1]} : vector<1x18x18x4xf32> to vector<1x16x16x4xf32>
    %11 = vector.shape_cast %10 : vector<1x16x16x4xf32> to vector<16x16x4xf32>
    %12 = vector.shape_cast %11 : vector<16x16x4xf32> to vector<256x4xf32>
    %13 = vector.extract_strided_slice %0 {offsets = [0, 1, 1, 0], sizes = [1, 16, 16, 4], strides = [1, 1, 1, 1]} : vector<1x18x18x4xf32> to vector<1x16x16x4xf32>
    %14 = vector.shape_cast %13 : vector<1x16x16x4xf32> to vector<16x16x4xf32>
    %15 = vector.shape_cast %14 : vector<16x16x4xf32> to vector<256x4xf32>
    %16 = vector.extract_strided_slice %0 {offsets = [0, 1, 2, 0], sizes = [1, 16, 16, 4], strides = [1, 1, 1, 1]} : vector<1x18x18x4xf32> to vector<1x16x16x4xf32>
    %17 = vector.shape_cast %16 : vector<1x16x16x4xf32> to vector<16x16x4xf32>
    %18 = vector.shape_cast %17 : vector<16x16x4xf32> to vector<256x4xf32>
    %19 = vector.extract_strided_slice %0 {offsets = [0, 2, 0, 0], sizes = [1, 16, 16, 4], strides = [1, 1, 1, 1]} : vector<1x18x18x4xf32> to vector<1x16x16x4xf32>
    %20 = vector.shape_cast %19 : vector<1x16x16x4xf32> to vector<16x16x4xf32>
    %21 = vector.shape_cast %20 : vector<16x16x4xf32> to vector<256x4xf32>
    %22 = vector.extract_strided_slice %0 {offsets = [0, 2, 1, 0], sizes = [1, 16, 16, 4], strides = [1, 1, 1, 1]} : vector<1x18x18x4xf32> to vector<1x16x16x4xf32>
    %23 = vector.shape_cast %22 : vector<1x16x16x4xf32> to vector<16x16x4xf32>
    %24 = vector.shape_cast %23 : vector<16x16x4xf32> to vector<256x4xf32>
    %25 = vector.extract_strided_slice %0 {offsets = [0, 2, 2, 0], sizes = [1, 16, 16, 4], strides = [1, 1, 1, 1]} : vector<1x18x18x4xf32> to vector<1x16x16x4xf32>
    %26 = vector.shape_cast %25 : vector<1x16x16x4xf32> to vector<16x16x4xf32>
    %27 = vector.shape_cast %26 : vector<16x16x4xf32> to vector<256x4xf32>
    %cst = arith.constant 0.000000e+00 : f32
    %28 = vector.broadcast %cst : f32 to vector<256x92xf32>
    %29 = tpu.concatenate %3, %6, %9, %12, %15, %18, %21, %24, %27, %28 in 1 : vector<256x4xf32>, vector<256x4xf32>, vector<256x4xf32>, vector<256x4xf32>, vector<256x4xf32>, vector<256x4xf32>, vector<256x4xf32>, vector<256x4xf32>, vector<256x4xf32>, vector<256x92xf32> -> vector<256x128xf32>
    %30 = arith.truncf %29 : vector<256x128xf32> to vector<256x128xbf16>
    %c0_3 = arith.constant 0 : index
    %c0_4 = arith.constant 0 : index
    %31 = vector.load %arg2[%c0_3, %c0_4] : memref<128x128xbf16, #tpu.memory_space<vmem>>, vector<128x128xbf16>
    %cst_5 = arith.constant dense<0.000000e+00> : vector<256x128xf32>
    %32 = tpu.matmul %30, %31, %cst_5 {dimension_numbers = #tpu.dot_dimension_numbers<[1], [0], [0], [1], [0, 0, 1, 1], [], []>} : vector<256x128xbf16>, vector<128x128xbf16>, vector<256x128xf32> -> vector<256x128xf32>
    %33 = vector.shape_cast %32 : vector<256x128xf32> to vector<1x16x16x128xf32>
    %c0_6 = arith.constant 0 : index
    %c0_7 = arith.constant 0 : index
    %c0_8 = arith.constant 0 : index
    %c0_9 = arith.constant 0 : index
    %34 = vector.load %arg3[%c0_6, %c0_7, %c0_8, %c0_9] : memref<1x16x16x128xf32, #tpu.memory_space<vmem>>, vector<1x16x16x128xf32>
    tpu.vector_store %arg3[%c0_6, %c0_7, %c0_8, %c0_9], %33 {strides = array<i32>} : memref<1x16x16x128xf32, #tpu.memory_space<vmem>>, vector<1x16x16x128xf32>,
    %c0_i32 = arith.constant 0 : i32
    %35 = arith.cmpi eq, %arg0, %c0_i32 : i32
    %36 = arith.extui %35 : i1 to i32
    %c0_i32_10 = arith.constant 0 : i32
    %37 = arith.cmpi ne, %36, %c0_i32_10 : i32
    scf.if %37 {
      %cst_17 = arith.constant 0.000000e+00 : f32
      %45 = vector.broadcast %cst_17 : f32 to vector<1x256xf32>
      %c0_18 = arith.constant 0 : index
      %c0_19 = arith.constant 0 : index
      %46 = vector.load %arg4[%c0_18, %c0_19] : memref<1x256xf32, #tpu.memory_space<vmem>>, vector<1x256xf32>
      tpu.vector_store %arg4[%c0_18, %c0_19], %45 {strides = array<i32>} : memref<1x256xf32, #tpu.memory_space<vmem>>, vector<1x256xf32>,
    } else {
    }
    %c0_11 = arith.constant 0 : index
    %c0_12 = arith.constant 0 : index
    %38 = vector.load %arg4[%c0_11, %c0_12] : memref<1x256xf32, #tpu.memory_space<vmem>>, vector<1x256xf32>
    %cst_13 = arith.constant 1.000000e+00 : f32
    %39 = vector.broadcast %cst_13 : f32 to vector<1x256xf32>
    %40 = arith.mulf %32, %32 : vector<256x128xf32>
    %41 = tpu.concatenate %32, %40 in 1 : vector<256x128xf32>, vector<256x128xf32> -> vector<256x256xf32>
    %cst_14 = arith.constant dense<0.000000e+00> : vector<1x256xf32>
    %42 = tpu.matmul %39, %41, %cst_14 {dimension_numbers = #tpu.dot_dimension_numbers<[1], [0], [0], [1], [0, 0, 1, 1], [], []>} : vector<1x256xf32>, vector<256x256xf32>, vector<1x256xf32> -> vector<1x256xf32>
    %43 = arith.addf %38, %42 : vector<1x256xf32>
    %c0_15 = arith.constant 0 : index
    %c0_16 = arith.constant 0 : index
    %44 = vector.load %arg4[%c0_15, %c0_16] : memref<1x256xf32, #tpu.memory_space<vmem>>, vector<1x256xf32>
    tpu.vector_store %arg4[%c0_15, %c0_16], %43 {strides = array<i32>} : memref<1x256xf32, #tpu.memory_space<vmem>>, vector<1x256xf32>,
    return
  }
  func.func @transform_0(%arg0: i32) -> (i32, i32, i32, i32) {
    %c0_i32 = arith.constant 0 : i32
    %c0_i32_0 = arith.constant 0 : i32
    %c0_i32_1 = arith.constant 0 : i32
    %c0_i32_2 = arith.constant 0 : i32
    return %arg0, %c0_i32, %c0_i32_0, %c0_i32_1 : i32, i32, i32, i32
  }
  func.func @transform_1(%arg0: i32) -> (i32, i32) {
    %c0_i32 = arith.constant 0 : i32
    %c0_i32_0 = arith.constant 0 : i32
    %c0_i32_1 = arith.constant 0 : i32
    return %c0_i32, %c0_i32_0 : i32, i32
  }
  func.func @transform_2(%arg0: i32) -> (i32, i32, i32, i32) {
    %c0_i32 = arith.constant 0 : i32
    %c0_i32_0 = arith.constant 0 : i32
    %c0_i32_1 = arith.constant 0 : i32
    %c0_i32_2 = arith.constant 0 : i32
    return %arg0, %c0_i32, %c0_i32_0, %c0_i32_1 : i32, i32, i32, i32
  }
  func.func @transform_3(%arg0: i32) -> (i32, i32) {
    %c0_i32 = arith.constant 0 : i32
    %c0_i32_0 = arith.constant 0 : i32
    %c0_i32_1 = arith.constant 0 : i32
    return %c0_i32, %c0_i32_0 : i32, i32
  }
}

</mosaic_0001>

<llo_original>
// kernel: tpu_custom_call.1
$region0: #{tpu_custom_call.1}
  #allocation0 [shape = 'u32[]', space=smem, size = 0x4, offset = 0x4, fixed_abs, tag = 'smem constant byte address 0x4 - core index']
  #allocation1 [shape = 'u32[72,128]{1,0:T(1,128)}', space=vmem, size = 0x9000, scoped, tag = 'internal scratch']
  %s0 = inlined_call_operand.vmem [shape: f32[2,18,18,4], index: 0, kind: input, shape index: {}]
  %s1 = inlined_call_operand.vmem [shape: bf16[128,128], index: 1, kind: input, shape index: {}]
  %s2 = inlined_call_operand.hbm [shape: f32[2,16,16,128], index: 2, kind: output, shape index: {0}]
  %s3 = inlined_call_operand.hbm [shape: f32[1,256], index: 3, kind: output, shape index: {1}]
  %4 = xla_tuple %s2, %s3
  %s5 = sld [smem:[#allocation0]]
  $region53: #{tpu_custom_call.1} parent=0
    _
  %s7 = ssub.s32 1, %s5
  %s8 = scalar_select 0, %s7, %s5
  $region1: #{tpu_custom_call.1} parent=0
    #allocation2 [shape = 'u8[262144]{0}', space=vmem, size = 0x40000, scoped, tag = 'output window, operand 0']
    #allocation3 [shape = 's32[2]{0}', space=sflag, size = 0x8, scoped, tag = 'scoped memory for tpu_custom_call.1']
    #allocation4 [shape = 'u8[1024]{0}', space=vmem, size = 0x400, scoped, tag = 'output window, operand 1, single buffered']
    #allocation5 [shape = 's32[1]{0}', space=sflag, size = 0x4, scoped, tag = 'scoped memory for tpu_custom_call.1']
    %9 = vsyncpa [#allocation3], 0
    %s10 = scalar_lea.sflag [#allocation3], 1
    %11 = vsyncpa %s10, 0
    %12 = vsyncpa [#allocation5], 0
    loop: start=0, step=1, limit=4
    $region2: #{tpu_custom_call.1} parent=1 // loop_pre_header
      _
    $region3: #{tpu_custom_call.1} parent=1 // loop_header
      %s14 = sphi 0, %s18
      %p15 = scmp.ge.s32.totalorder %s14, 4
      %s24 = sphi 0, %s26
      %s27 = sphi 0, %s24
      %s28 = sphi 0, %s27
      %s44 = sphi 0, %s28
      %s48 = sphi 0, %s48
      %s50 = sphi 0, %s48
      %s51 = sphi 0, %s50
      %s65 = sphi 0, %s51
      %s71 = sphi 0, %s73
      %s74 = sphi 0, %s71
      %s75 = sphi 0, %s74
      %s91 = sphi 0, %s75
      %s95 = sphi 0, %s95
      %s97 = sphi 0, %s95
      %s98 = sphi 0, %s97
      %s112 = sphi 0, %s98
    $region4: #{tpu_custom_call.1} parent=1 // loop_header_branch
      %17 = sbr.rel (%p15) target = $region8
    $region5: #{tpu_custom_call.1} parent=1 // loop_body
      %s19 = ssub.s32 %s14, 1
      %s20 = ssub.s32 %s14, 2
      %s21 = sadd.s32 %s14, 1
      %s22 = ssub.s32 %s14, %s21
      %p23 = scmp.eq.s32.totalorder %s22, 0
      %s25 = sadd.s32 %s24, 1
      %s26 = scalar_select %p23, %s24, %s25
      %p29 = pneg %p23
      %p30 = scmp.eq.s32.totalorder %s14, 1
      %p31 = por %p29, %p30
      %p32 = scmp.ne.s32.totalorder %s24, %s27
      %p33 = scmp.eq.s32.totalorder %s14, 0
      %p34 = por %p32, %p33
      %p35 = scmp.ne.s32.totalorder %s24, %s27
      %p36 = scmp.eq.s32.totalorder %s19, 1
      %p37 = por %p35, %p36
      %p38 = scmp.ne.s32.totalorder %s27, %s28
      %p39 = scmp.eq.s32.totalorder %s19, 0
      %p40 = por %p38, %p39
      %p41 = scmp.ne.s32.totalorder %s27, %s28
      %p42 = scmp.eq.s32.totalorder %s20, 1
      %p43 = por %p41, %p42
      %p45 = scmp.ne.s32.totalorder %s28, %s44
      %p46 = scmp.eq.s32.totalorder %s20, 0
      %p47 = por %p45, %p46
      %s49 = sadd.s32 %s48, 1
      %p52 = scmp.eq.s32.totalorder %s14, 1
      %p53 = scmp.ne.s32.totalorder %s48, %s50
      %p54 = scmp.eq.s32.totalorder %s14, 0
      %p55 = por %p53, %p54
      %p56 = scmp.ne.s32.totalorder %s48, %s50
      %p57 = scmp.eq.s32.totalorder %s19, 1
      %p58 = por %p56, %p57
      %p59 = scmp.ne.s32.totalorder %s50, %s51
      %p60 = scmp.eq.s32.totalorder %s19, 0
      %p61 = por %p59, %p60
      %p62 = scmp.ne.s32.totalorder %s50, %s51
      %p63 = scmp.eq.s32.totalorder %s20, 1
      %p64 = por %p62, %p63
      %p66 = scmp.ne.s32.totalorder %s51, %s65
      %p67 = scmp.eq.s32.totalorder %s20, 0
      %p68 = por %p66, %p67
      %s69 = ssub.s32 %s14, %s21
      %p70 = scmp.eq.s32.totalorder %s69, 0
      %s72 = sadd.s32 %s71, 1
      %s73 = scalar_select %p70, %s71, %s72
      %p76 = pneg %p70
      %p77 = scmp.eq.s32.totalorder %s14, 1
      %p78 = por %p76, %p77
      %p79 = scmp.ne.s32.totalorder %s71, %s74
      %p80 = scmp.eq.s32.totalorder %s14, 0
      %p81 = por %p79, %p80
      %p82 = scmp.ne.s32.totalorder %s71, %s74
      %p83 = scmp.eq.s32.totalorder %s19, 1
      %p84 = por %p82, %p83
      %p85 = scmp.ne.s32.totalorder %s74, %s75
      %p86 = scmp.eq.s32.totalorder %s19, 0
      %p87 = por %p85, %p86
      %p88 = scmp.ne.s32.totalorder %s74, %s75
      %p89 = scmp.eq.s32.totalorder %s20, 1
      %p90 = por %p88, %p89
      %p92 = scmp.ne.s32.totalorder %s75, %s91
      %p93 = scmp.eq.s32.totalorder %s20, 0
      %p94 = por %p92, %p93
      %s96 = sadd.s32 %s95, 1
      %p99 = scmp.eq.s32.totalorder %s14, 1
      %p100 = scmp.ne.s32.totalorder %s95, %s97
      %p101 = scmp.eq.s32.totalorder %s14, 0
      %p102 = por %p100, %p101
      %p103 = scmp.ne.s32.totalorder %s95, %s97
      %p104 = scmp.eq.s32.totalorder %s19, 1
      %p105 = por %p103, %p104
      %p106 = scmp.ne.s32.totalorder %s97, %s98
      %p107 = scmp.eq.s32.totalorder %s19, 0
      %p108 = por %p106, %p107
      %p109 = scmp.ne.s32.totalorder %s97, %s98
      %p110 = scmp.eq.s32.totalorder %s20, 1
      %p111 = por %p109, %p110
      %p113 = scmp.ne.s32.totalorder %s98, %s112
      %p114 = scmp.eq.s32.totalorder %s20, 0
      %p115 = por %p113, %p114
      %p116 = scmp.le.s32.totalorder 1, %s14
      %p117 = scmp.lt.s32.totalorder %s14, 3
      %p118 = pnand %p116, %p117
      %p119 = pneg %p118
      // Predicated region
      $region9: #{tpu_custom_call.1} parent=5 // pred_check
        _
      $region10: #{tpu_custom_call.1} parent=5 // pred_check_branch
        %121 = sbr.rel (%p118) target = $region12
      $region11: #{tpu_custom_call.1} parent=5 // pred_region
        %s122 = ssub.s32 %s14, 1
        // Predicated region
        $region13: #{tpu_custom_call.1} parent=11 // pred_check
          %p123 = pneg %p61
        $region14: #{tpu_custom_call.1} parent=11 // pred_check_branch
          %125 = sbr.rel (%p123) target = $region16
        $region15: #{tpu_custom_call.1} parent=11 // pred_region
          _
        $region16: #{tpu_custom_call.1} parent=11 // pred_fallthru
          _
      $region12: #{tpu_custom_call.1} parent=5 // pred_fallthru
        _
      %p126 = scmp.lt.s32.totalorder %s14, 2
      // Predicated region
      $region17: #{tpu_custom_call.1} parent=5 // pred_check
        %p127 = pneg %p126
      $region18: #{tpu_custom_call.1} parent=5 // pred_check_branch
        %129 = sbr.rel (%p127) target = $region20
      $region19: #{tpu_custom_call.1} parent=5 // pred_region
        // Predicated region
        $region21: #{tpu_custom_call.1} parent=19 // pred_check
          %p130 = pneg %p34
        $region22: #{tpu_custom_call.1} parent=19 // pred_check_branch
          %132 = sbr.rel (%p130) target = $region24
        $region23: #{tpu_custom_call.1} parent=19 // pred_region
          %p133 = scmp.lt.s32.totalorder %s14, 1
          %s134 = scalar_select %p133, %s14, 1
          %s135 = smul.addr %s134, 54
          %s136 = smul.addr %s135, 8
          %s137 = scalar_lea.vmem %s0, %s136
        $region24: #{tpu_custom_call.1} parent=19 // pred_fallthru
          _
      $region20: #{tpu_custom_call.1} parent=5 // pred_fallthru
        _
      %p138 = scmp.le.s32.totalorder 1, %s14
      %p139 = scmp.lt.s32.totalorder %s14, 3
      %p140 = pnand %p138, %p139
      %p141 = pneg %p140
      // Predicated region
      $region25: #{tpu_custom_call.1} parent=5 // pred_check
        _
      $region26: #{tpu_custom_call.1} parent=5 // pred_check_branch
        %143 = sbr.rel (%p140) target = $region28
      $region27: #{tpu_custom_call.1} parent=5 // pred_region
        %s144 = ssub.s32 %s14, 1
        %p145 = scmp.lt.s32.totalorder %s19, 1
        %s146 = scalar_select %p145, %s19, 1
        %s147 = smul.addr %s146, 54
        %s148 = smul.addr %s147, 8
        %s149 = scalar_lea.vmem %s0, %s148
        %p150 = pneg %p40
        %p151 = pneg %p37
        %p152 = pneg %p61
        %p153 = pneg %p58
        %p154 = pneg %p87
        %p155 = pneg %p84
        %s156 = sand.u32 %s74, 1
        %s157 = scalar_lea.sflag [#allocation3], %s156
        %s158 = sand.u32 %s74, 1
        %s159 = smul.addr %s158, 256
        %s160 = scalar_lea.vmem [#allocation2], %s159
        %p161 = pneg %p108
        %p162 = pneg %p105
        %p163 = scmp.lt.s32.totalorder %s19, 1
        %s164 = scalar_select %p163, %s19, 1
        %s165 = smul.addr %s164, 54
        %s166 = smul.addr %s165, 8
        %s167 = scalar_lea.vmem %s0, %s166
        %v168 = vld [vmem:[%s167] sm:$0xff]
        %v169 = vld [vmem:[%s167 + $0x8] sm:$0xff]
        %v170 = vld [vmem:[%s167 + $0x10] sm:$0x3]
        %v171 = vld [vmem:[%s167 + $0x18] sm:$0xff]
        %v172 = vld [vmem:[%s167 + $0x20] sm:$0xff]
        %v173 = vld [vmem:[%s167 + $0x28] sm:$0x3]
        %v174 = vld [vmem:[%s167 + $0x30] sm:$0xff]
        %v175 = vld [vmem:[%s167 + $0x38] sm:$0xff]
        %v176 = vld [vmem:[%s167 + $0x40] sm:$0x3]
        %v177 = vld [vmem:[%s167 + $0x48] sm:$0xff]
        %v178 = vld [vmem:[%s167 + $0x50] sm:$0xff]
        %v179 = vld [vmem:[%s167 + $0x58] sm:$0x3]
        %v180 = vld [vmem:[%s167 + $0x60] sm:$0xff]
        %v181 = vld [vmem:[%s167 + $0x68] sm:$0xff]
        %v182 = vld [vmem:[%s167 + $0x70] sm:$0x3]
        %v183 = vld [vmem:[%s167 + $0x78] sm:$0xff]
        %v184 = vld [vmem:[%s167 + $0x80] sm:$0xff]
        %v185 = vld [vmem:[%s167 + $0x88] sm:$0x3]
        %v186 = vld [vmem:[%s167 + $0x90] sm:$0xff]
        %v187 = vld [vmem:[%s167 + $0x98] sm:$0xff]
        %v188 = vld [vmem:[%s167 + $0xa0] sm:$0x3]
        %v189 = vld [vmem:[%s167 + $0xa8] sm:$0xff]
        %v190 = vld [vmem:[%s167 + $0xb0] sm:$0xff]
        %v191 = vld [vmem:[%s167 + $0xb8] sm:$0x3]
        %v192 = vld [vmem:[%s167 + $0xc0] sm:$0xff]
        %v193 = vld [vmem:[%s167 + $0xc8] sm:$0xff]
        %v194 = vld [vmem:[%s167 + $0xd0] sm:$0x3]
        %v195 = vld [vmem:[%s167 + $0xd8] sm:$0xff]
        %v196 = vld [vmem:[%s167 + $0xe0] sm:$0xff]
        %v197 = vld [vmem:[%s167 + $0xe8] sm:$0x3]
        %v198 = vld [vmem:[%s167 + $0xf0] sm:$0xff]
        %v199 = vld [vmem:[%s167 + $0xf8] sm:$0xff]
        %v200 = vld [vmem:[%s167 + $0x100] sm:$0x3]
        %v201 = vld [vmem:[%s167 + $0x108] sm:$0xff]
        %v202 = vld [vmem:[%s167 + $0x110] sm:$0xff]
        %v203 = vld [vmem:[%s167 + $0x118] sm:$0x3]
        %v204 = vld [vmem:[%s167 + $0x120] sm:$0xff]
        %v205 = vld [vmem:[%s167 + $0x128] sm:$0xff]
        %v206 = vld [vmem:[%s167 + $0x130] sm:$0x3]
        %v207 = vld [vmem:[%s167 + $0x138] sm:$0xff]
        %v208 = vld [vmem:[%s167 + $0x140] sm:$0xff]
        %v209 = vld [vmem:[%s167 + $0x148] sm:$0x3]
        %v210 = vld [vmem:[%s167 + $0x150] sm:$0xff]
        %v211 = vld [vmem:[%s167 + $0x158] sm:$0xff]
        %v212 = vld [vmem:[%s167 + $0x160] sm:$0x3]
        %v213 = vld [vmem:[%s167 + $0x168] sm:$0xff]
        %v214 = vld [vmem:[%s167 + $0x170] sm:$0xff]
        %v215 = vld [vmem:[%s167 + $0x178] sm:$0x3]
        %v216 = vld [vmem:[%s167 + $0x180] sm:$0xff]
        %v217 = vld [vmem:[%s167 + $0x188] sm:$0xff]
        %v218 = vld [vmem:[%s167 + $0x190] sm:$0x3]
        %v219 = vld [vmem:[%s167 + $0x198] sm:$0xff]
        %v220 = vld [vmem:[%s167 + $0x1a0] sm:$0xff]
        %v221 = vld [vmem:[%s167 + $0x1a8] sm:$0x3]
        %vm270 = vcmask 1046528
        %v271 = vrot.slane %v168, 1
        %v272 = vrot.slane %v169, 1
        %v273 = vsel %vm270, %v271, %v272
        %v274 = vrot.slane %v170, 1
        %v275 = vsel %vm270, %v272, %v274
        %v276 = vrot.slane %v171, 1
        %v277 = vrot.slane %v172, 1
        %v278 = vsel %vm270, %v276, %v277
        %v279 = vrot.slane %v173, 1
        %v280 = vsel %vm270, %v277, %v279
        %v281 = vrot.slane %v174, 1
        %v282 = vrot.slane %v175, 1
        %v283 = vsel %vm270, %v281, %v282
        %v284 = vrot.slane %v176, 1
        %v285 = vsel %vm270, %v282, %v284
        %v286 = vrot.slane %v177, 1
        %v287 = vrot.slane %v178, 1
        %v288 = vsel %vm270, %v286, %v287
        %v289 = vrot.slane %v179, 1
        %v290 = vsel %vm270, %v287, %v289
        %v291 = vrot.slane %v180, 1
        %v292 = vrot.slane %v181, 1
        %v293 = vsel %vm270, %v291, %v292
        %v294 = vrot.slane %v182, 1
        %v295 = vsel %vm270, %v292, %v294
        %v296 = vrot.slane %v183, 1
        %v297 = vrot.slane %v184, 1
        %v298 = vsel %vm270, %v296, %v297
        %v299 = vrot.slane %v185, 1
        %v300 = vsel %vm270, %v297, %v299
        %v301 = vrot.slane %v186, 1
        %v302 = vrot.slane %v187, 1
        %v303 = vsel %vm270, %v301, %v302
        %v304 = vrot.slane %v188, 1
        %v305 = vsel %vm270, %v302, %v304
        %v306 = vrot.slane %v189, 1
        %v307 = vrot.slane %v190, 1
        %v308 = vsel %vm270, %v306, %v307
        %v309 = vrot.slane %v191, 1
        %v310 = vsel %vm270, %v307, %v309
        %v311 = vrot.slane %v192, 1
        %v312 = vrot.slane %v193, 1
        %v313 = vsel %vm270, %v311, %v312
        %v314 = vrot.slane %v194, 1
        %v315 = vsel %vm270, %v312, %v314
        %v316 = vrot.slane %v195, 1
        %v317 = vrot.slane %v196, 1
        %v318 = vsel %vm270, %v316, %v317
        %v319 = vrot.slane %v197, 1
        %v320 = vsel %vm270, %v317, %v319
        %v321 = vrot.slane %v198, 1
        %v322 = vrot.slane %v199, 1
        %v323 = vsel %vm270, %v321, %v322
        %v324 = vrot.slane %v200, 1
        %v325 = vsel %vm270, %v322, %v324
        %v326 = vrot.slane %v201, 1
        %v327 = vrot.slane %v202, 1
        %v328 = vsel %vm270, %v326, %v327
        %v329 = vrot.slane %v203, 1
        %v330 = vsel %vm270, %v327, %v329
        %v331 = vrot.slane %v204, 1
        %v332 = vrot.slane %v205, 1
        %v333 = vsel %vm270, %v331, %v332
        %v334 = vrot.slane %v206, 1
        %v335 = vsel %vm270, %v332, %v334
        %v336 = vrot.slane %v207, 1
        %v337 = vrot.slane %v208, 1
        %v338 = vsel %vm270, %v336, %v337
        %v339 = vrot.slane %v209, 1
        %v340 = vsel %vm270, %v337, %v339
        %v341 = vrot.slane %v210, 1
        %v342 = vrot.slane %v211, 1
        %v343 = vsel %vm270, %v341, %v342
        %v344 = vrot.slane %v212, 1
        %v345 = vsel %vm270, %v342, %v344
        %v346 = vrot.slane %v213, 1
        %v347 = vrot.slane %v214, 1
        %v348 = vsel %vm270, %v346, %v347
        %v349 = vrot.slane %v215, 1
        %v350 = vsel %vm270, %v347, %v349
        %vm351 = vcmask 1045504
        %v352 = vrot.slane %v168, 2
        %v353 = vrot.slane %v169, 2
        %v354 = vsel %vm351, %v352, %v353
        %v355 = vrot.slane %v170, 2
        %v356 = vsel %vm351, %v353, %v355
        %v357 = vrot.slane %v171, 2
        %v358 = vrot.slane %v172, 2
        %v359 = vsel %vm351, %v357, %v358
        %v360 = vrot.slane %v173, 2
        %v361 = vsel %vm351, %v358, %v360
        %v362 = vrot.slane %v174, 2
        %v363 = vrot.slane %v175, 2
        %v364 = vsel %vm351, %v362, %v363
        %v365 = vrot.slane %v176, 2
        %v366 = vsel %vm351, %v363, %v365
        %v367 = vrot.slane %v177, 2
        %v368 = vrot.slane %v178, 2
        %v369 = vsel %vm351, %v367, %v368
        %v370 = vrot.slane %v179, 2
        %v371 = vsel %vm351, %v368, %v370
        %v372 = vrot.slane %v180, 2
        %v373 = vrot.slane %v181, 2
        %v374 = vsel %vm351, %v372, %v373
        %v375 = vrot.slane %v182, 2
        %v376 = vsel %vm351, %v373, %v375
        %v377 = vrot.slane %v183, 2
        %v378 = vrot.slane %v184, 2
        %v379 = vsel %vm351, %v377, %v378
        %v380 = vrot.slane %v185, 2
        %v381 = vsel %vm351, %v378, %v380
        %v382 = vrot.slane %v186, 2
        %v383 = vrot.slane %v187, 2
        %v384 = vsel %vm351, %v382, %v383
        %v385 = vrot.slane %v188, 2
        %v386 = vsel %vm351, %v383, %v385
        %v387 = vrot.slane %v189, 2
        %v388 = vrot.slane %v190, 2
        %v389 = vsel %vm351, %v387, %v388
        %v390 = vrot.slane %v191, 2
        %v391 = vsel %vm351, %v388, %v390
        %v392 = vrot.slane %v192, 2
        %v393 = vrot.slane %v193, 2
        %v394 = vsel %vm351, %v392, %v393
        %v395 = vrot.slane %v194, 2
        %v396 = vsel %vm351, %v393, %v395
        %v397 = vrot.slane %v195, 2
        %v398 = vrot.slane %v196, 2
        %v399 = vsel %vm351, %v397, %v398
        %v400 = vrot.slane %v197, 2
        %v401 = vsel %vm351, %v398, %v400
        %v402 = vrot.slane %v198, 2
        %v403 = vrot.slane %v199, 2
        %v404 = vsel %vm351, %v402, %v403
        %v405 = vrot.slane %v200, 2
        %v406 = vsel %vm351, %v403, %v405
        %v407 = vrot.slane %v201, 2
        %v408 = vrot.slane %v202, 2
        %v409 = vsel %vm351, %v407, %v408
        %v410 = vrot.slane %v203, 2
        %v411 = vsel %vm351, %v408, %v410
        %v412 = vrot.slane %v204, 2
        %v413 = vrot.slane %v205, 2
        %v414 = vsel %vm351, %v412, %v413
        %v415 = vrot.slane %v206, 2
        %v416 = vsel %vm351, %v413, %v415
        %v417 = vrot.slane %v207, 2
        %v418 = vrot.slane %v208, 2
        %v419 = vsel %vm351, %v417, %v418
        %v420 = vrot.slane %v209, 2
        %v421 = vsel %vm351, %v418, %v420
        %v422 = vrot.slane %v210, 2
        %v423 = vrot.slane %v211, 2
        %v424 = vsel %vm351, %v422, %v423
        %v425 = vrot.slane %v212, 2
        %v426 = vsel %vm351, %v423, %v425
        %v427 = vrot.slane %v213, 2
        %v428 = vrot.slane %v214, 2
        %v429 = vsel %vm351, %v427, %v428
        %v430 = vrot.slane %v215, 2
        %v431 = vsel %vm351, %v428, %v430
        %v435 = vrot.slane %v216, 1
        %v436 = vrot.slane %v217, 1
        %v437 = vsel %vm270, %v435, %v436
        %v438 = vrot.slane %v218, 1
        %v439 = vsel %vm270, %v436, %v438
        %v440 = vrot.slane %v216, 2
        %v441 = vrot.slane %v217, 2
        %v442 = vsel %vm351, %v440, %v441
        %v443 = vrot.slane %v218, 2
        %v444 = vsel %vm351, %v441, %v443
        %v448 = vrot.slane %v219, 1
        %v449 = vrot.slane %v220, 1
        %v450 = vsel %vm270, %v448, %v449
        %v451 = vrot.slane %v221, 1
        %v452 = vsel %vm270, %v449, %v451
        %v453 = vrot.slane %v219, 2
        %v454 = vrot.slane %v220, 2
        %v455 = vsel %vm351, %v453, %v454
        %v456 = vrot.slane %v221, 2
        %v457 = vsel %vm351, %v454, %v456
        %458 = vrot.lane.b32.xlu0 %v273, 4
        %v459 = vpop.permute.xlu0 %458
        %460 = vrot.lane.b32.xlu0 %v275, 4
        %v461 = vpop.permute.xlu0 %460
        %462 = vrot.lane.b32.xlu0 %v278, 4
        %v463 = vpop.permute.xlu0 %462
        %464 = vrot.lane.b32.xlu0 %v280, 4
        %v465 = vpop.permute.xlu0 %464
        %466 = vrot.lane.b32.xlu0 %v283, 4
        %v467 = vpop.permute.xlu0 %466
        %468 = vrot.lane.b32.xlu0 %v285, 4
        %v469 = vpop.permute.xlu0 %468
        %470 = vrot.lane.b32.xlu0 %v288, 4
        %v471 = vpop.permute.xlu0 %470
        %472 = vrot.lane.b32.xlu0 %v290, 4
        %v473 = vpop.permute.xlu0 %472
        %474 = vrot.lane.b32.xlu0 %v293, 4
        %v475 = vpop.permute.xlu0 %474
        %476 = vrot.lane.b32.xlu0 %v295, 4
        %v477 = vpop.permute.xlu0 %476
        %478 = vrot.lane.b32.xlu0 %v298, 4
        %v479 = vpop.permute.xlu0 %478
        %480 = vrot.lane.b32.xlu0 %v300, 4
        %v481 = vpop.permute.xlu0 %480
        %482 = vrot.lane.b32.xlu0 %v303, 4
        %v483 = vpop.permute.xlu0 %482
        %484 = vrot.lane.b32.xlu0 %v305, 4
        %v485 = vpop.permute.xlu0 %484
        %486 = vrot.lane.b32.xlu0 %v308, 4
        %v487 = vpop.permute.xlu0 %486
        %488 = vrot.lane.b32.xlu0 %v310, 4
        %v489 = vpop.permute.xlu0 %488
        %490 = vrot.lane.b32.xlu0 %v313, 4
        %v491 = vpop.permute.xlu0 %490
        %492 = vrot.lane.b32.xlu0 %v315, 4
        %v493 = vpop.permute.xlu0 %492
        %494 = vrot.lane.b32.xlu0 %v318, 4
        %v495 = vpop.permute.xlu0 %494
        %496 = vrot.lane.b32.xlu0 %v320, 4
        %v497 = vpop.permute.xlu0 %496
        %498 = vrot.lane.b32.xlu0 %v323, 4
        %v499 = vpop.permute.xlu0 %498
        %500 = vrot.lane.b32.xlu0 %v325, 4
        %v501 = vpop.permute.xlu0 %500
        %502 = vrot.lane.b32.xlu0 %v328, 4
        %v503 = vpop.permute.xlu0 %502
        %504 = vrot.lane.b32.xlu0 %v330, 4
        %v505 = vpop.permute.xlu0 %504
        %506 = vrot.lane.b32.xlu0 %v333, 4
        %v507 = vpop.permute.xlu0 %506
        %508 = vrot.lane.b32.xlu0 %v335, 4
        %v509 = vpop.permute.xlu0 %508
        %510 = vrot.lane.b32.xlu0 %v338, 4
        %v511 = vpop.permute.xlu0 %510
        %512 = vrot.lane.b32.xlu0 %v340, 4
        %v513 = vpop.permute.xlu0 %512
        %514 = vrot.lane.b32.xlu0 %v343, 4
        %v515 = vpop.permute.xlu0 %514
        %516 = vrot.lane.b32.xlu0 %v345, 4
        %v517 = vpop.permute.xlu0 %516
        %518 = vrot.lane.b32.xlu0 %v348, 4
        %v519 = vpop.permute.xlu0 %518
        %520 = vrot.lane.b32.xlu0 %v350, 4
        %v521 = vpop.permute.xlu0 %520
        %554 = vrot.lane.b32.xlu0 %v354, 8
        %v555 = vpop.permute.xlu0 %554
        %556 = vrot.lane.b32.xlu0 %v356, 8
        %v557 = vpop.permute.xlu0 %556
        %558 = vrot.lane.b32.xlu0 %v359, 8
        %v559 = vpop.permute.xlu0 %558
        %560 = vrot.lane.b32.xlu0 %v361, 8
        %v561 = vpop.permute.xlu0 %560
        %562 = vrot.lane.b32.xlu0 %v364, 8
        %v563 = vpop.permute.xlu0 %562
        %564 = vrot.lane.b32.xlu0 %v366, 8
        %v565 = vpop.permute.xlu0 %564
        %566 = vrot.lane.b32.xlu0 %v369, 8
        %v567 = vpop.permute.xlu0 %566
        %568 = vrot.lane.b32.xlu0 %v371, 8
        %v569 = vpop.permute.xlu0 %568
        %570 = vrot.lane.b32.xlu0 %v374, 8
        %v571 = vpop.permute.xlu0 %570
        %572 = vrot.lane.b32.xlu0 %v376, 8
        %v573 = vpop.permute.xlu0 %572
        %574 = vrot.lane.b32.xlu0 %v379, 8
        %v575 = vpop.permute.xlu0 %574
        %576 = vrot.lane.b32.xlu0 %v381, 8
        %v577 = vpop.permute.xlu0 %576
        %578 = vrot.lane.b32.xlu0 %v384, 8
        %v579 = vpop.permute.xlu0 %578
        %580 = vrot.lane.b32.xlu0 %v386, 8
        %v581 = vpop.permute.xlu0 %580
        %582 = vrot.lane.b32.xlu0 %v389, 8
        %v583 = vpop.permute.xlu0 %582
        %584 = vrot.lane.b32.xlu0 %v391, 8
        %v585 = vpop.permute.xlu0 %584
        %586 = vrot.lane.b32.xlu0 %v394, 8
        %v587 = vpop.permute.xlu0 %586
        %588 = vrot.lane.b32.xlu0 %v396, 8
        %v589 = vpop.permute.xlu0 %588
        %590 = vrot.lane.b32.xlu0 %v399, 8
        %v591 = vpop.permute.xlu0 %590
        %592 = vrot.lane.b32.xlu0 %v401, 8
        %v593 = vpop.permute.xlu0 %592
        %594 = vrot.lane.b32.xlu0 %v404, 8
        %v595 = vpop.permute.xlu0 %594
        %596 = vrot.lane.b32.xlu0 %v406, 8
        %v597 = vpop.permute.xlu0 %596
        %598 = vrot.lane.b32.xlu0 %v409, 8
        %v599 = vpop.permute.xlu0 %598
        %600 = vrot.lane.b32.xlu0 %v411, 8
        %v601 = vpop.permute.xlu0 %600
        %602 = vrot.lane.b32.xlu0 %v414, 8
        %v603 = vpop.permute.xlu0 %602
        %604 = vrot.lane.b32.xlu0 %v416, 8
        %v605 = vpop.permute.xlu0 %604
        %606 = vrot.lane.b32.xlu0 %v419, 8
        %v607 = vpop.permute.xlu0 %606
        %608 = vrot.lane.b32.xlu0 %v421, 8
        %v609 = vpop.permute.xlu0 %608
        %610 = vrot.lane.b32.xlu0 %v424, 8
        %v611 = vpop.permute.xlu0 %610
        %612 = vrot.lane.b32.xlu0 %v426, 8
        %v613 = vpop.permute.xlu0 %612
        %614 = vrot.lane.b32.xlu0 %v429, 8
        %v615 = vpop.permute.xlu0 %614
        %616 = vrot.lane.b32.xlu0 %v431, 8
        %v617 = vpop.permute.xlu0 %616
        %650 = vrot.lane.b32.xlu0 %v171, 12
        %v651 = vpop.permute.xlu0 %650
        %652 = vrot.lane.b32.xlu0 %v172, 12
        %v653 = vpop.permute.xlu0 %652
        %654 = vrot.lane.b32.xlu0 %v174, 12
        %v655 = vpop.permute.xlu0 %654
        %656 = vrot.lane.b32.xlu0 %v175, 12
        %v657 = vpop.permute.xlu0 %656
        %658 = vrot.lane.b32.xlu0 %v177, 12
        %v659 = vpop.permute.xlu0 %658
        %660 = vrot.lane.b32.xlu0 %v178, 12
        %v661 = vpop.permute.xlu0 %660
        %662 = vrot.lane.b32.xlu0 %v180, 12
        %v663 = vpop.permute.xlu0 %662
        %664 = vrot.lane.b32.xlu0 %v181, 12
        %v665 = vpop.permute.xlu0 %664
        %666 = vrot.lane.b32.xlu0 %v183, 12
        %v667 = vpop.permute.xlu0 %666
        %668 = vrot.lane.b32.xlu0 %v184, 12
        %v669 = vpop.permute.xlu0 %668
        %670 = vrot.lane.b32.xlu0 %v186, 12
        %v671 = vpop.permute.xlu0 %670
        %672 = vrot.lane.b32.xlu0 %v187, 12
        %v673 = vpop.permute.xlu0 %672
        %674 = vrot.lane.b32.xlu0 %v189, 12
        %v675 = vpop.permute.xlu0 %674
        %676 = vrot.lane.b32.xlu0 %v190, 12
        %v677 = vpop.permute.xlu0 %676
        %678 = vrot.lane.b32.xlu0 %v192, 12
        %v679 = vpop.permute.xlu0 %678
        %680 = vrot.lane.b32.xlu0 %v193, 12
        %v681 = vpop.permute.xlu0 %680
        %682 = vrot.lane.b32.xlu0 %v195, 12
        %v683 = vpop.permute.xlu0 %682
        %684 = vrot.lane.b32.xlu0 %v196, 12
        %v685 = vpop.permute.xlu0 %684
        %686 = vrot.lane.b32.xlu0 %v198, 12
        %v687 = vpop.permute.xlu0 %686
        %688 = vrot.lane.b32.xlu0 %v199, 12
        %v689 = vpop.permute.xlu0 %688
        %690 = vrot.lane.b32.xlu0 %v201, 12
        %v691 = vpop.permute.xlu0 %690
        %692 = vrot.lane.b32.xlu0 %v202, 12
        %v693 = vpop.permute.xlu0 %692
        %694 = vrot.lane.b32.xlu0 %v204, 12
        %v695 = vpop.permute.xlu0 %694
        %696 = vrot.lane.b32.xlu0 %v205, 12
        %v697 = vpop.permute.xlu0 %696
        %698 = vrot.lane.b32.xlu0 %v207, 12
        %v699 = vpop.permute.xlu0 %698
        %700 = vrot.lane.b32.xlu0 %v208, 12
        %v701 = vpop.permute.xlu0 %700
        %702 = vrot.lane.b32.xlu0 %v210, 12
        %v703 = vpop.permute.xlu0 %702
        %704 = vrot.lane.b32.xlu0 %v211, 12
        %v705 = vpop.permute.xlu0 %704
        %706 = vrot.lane.b32.xlu0 %v213, 12
        %v707 = vpop.permute.xlu0 %706
        %708 = vrot.lane.b32.xlu0 %v214, 12
        %v709 = vpop.permute.xlu0 %708
        %710 = vrot.lane.b32.xlu0 %v216, 12
        %v711 = vpop.permute.xlu0 %710
        %712 = vrot.lane.b32.xlu0 %v217, 12
        %v713 = vpop.permute.xlu0 %712
        %746 = vrot.lane.b32.xlu0 %v278, 16
        %v747 = vpop.permute.xlu0 %746
        %748 = vrot.lane.b32.xlu0 %v280, 16
        %v749 = vpop.permute.xlu0 %748
        %750 = vrot.lane.b32.xlu0 %v283, 16
        %v751 = vpop.permute.xlu0 %750
        %752 = vrot.lane.b32.xlu0 %v285, 16
        %v753 = vpop.permute.xlu0 %752
        %754 = vrot.lane.b32.xlu0 %v288, 16
        %v755 = vpop.permute.xlu0 %754
        %756 = vrot.lane.b32.xlu0 %v290, 16
        %v757 = vpop.permute.xlu0 %756
        %758 = vrot.lane.b32.xlu0 %v293, 16
        %v759 = vpop.permute.xlu0 %758
        %760 = vrot.lane.b32.xlu0 %v295, 16
        %v761 = vpop.permute.xlu0 %760
        %762 = vrot.lane.b32.xlu0 %v298, 16
        %v763 = vpop.permute.xlu0 %762
        %764 = vrot.lane.b32.xlu0 %v300, 16
        %v765 = vpop.permute.xlu0 %764
        %766 = vrot.lane.b32.xlu0 %v303, 16
        %v767 = vpop.permute.xlu0 %766
        %768 = vrot.lane.b32.xlu0 %v305, 16
        %v769 = vpop.permute.xlu0 %768
        %770 = vrot.lane.b32.xlu0 %v308, 16
        %v771 = vpop.permute.xlu0 %770
        %772 = vrot.lane.b32.xlu0 %v310, 16
        %v773 = vpop.permute.xlu0 %772
        %774 = vrot.lane.b32.xlu0 %v313, 16
        %v775 = vpop.permute.xlu0 %774
        %776 = vrot.lane.b32.xlu0 %v315, 16
        %v777 = vpop.permute.xlu0 %776
        %778 = vrot.lane.b32.xlu0 %v318, 16
        %v779 = vpop.permute.xlu0 %778
        %780 = vrot.lane.b32.xlu0 %v320, 16
        %v781 = vpop.permute.xlu0 %780
        %782 = vrot.lane.b32.xlu0 %v323, 16
        %v783 = vpop.permute.xlu0 %782
        %784 = vrot.lane.b32.xlu0 %v325, 16
        %v785 = vpop.permute.xlu0 %784
        %786 = vrot.lane.b32.xlu0 %v328, 16
        %v787 = vpop.permute.xlu0 %786
        %788 = vrot.lane.b32.xlu0 %v330, 16
        %v789 = vpop.permute.xlu0 %788
        %790 = vrot.lane.b32.xlu0 %v333, 16
        %v791 = vpop.permute.xlu0 %790
        %792 = vrot.lane.b32.xlu0 %v335, 16
        %v793 = vpop.permute.xlu0 %792
        %794 = vrot.lane.b32.xlu0 %v338, 16
        %v795 = vpop.permute.xlu0 %794
        %796 = vrot.lane.b32.xlu0 %v340, 16
        %v797 = vpop.permute.xlu0 %796
        %798 = vrot.lane.b32.xlu0 %v343, 16
        %v799 = vpop.permute.xlu0 %798
        %800 = vrot.lane.b32.xlu0 %v345, 16
        %v801 = vpop.permute.xlu0 %800
        %802 = vrot.lane.b32.xlu0 %v348, 16
        %v803 = vpop.permute.xlu0 %802
        %804 = vrot.lane.b32.xlu0 %v350, 16
        %v805 = vpop.permute.xlu0 %804
        %806 = vrot.lane.b32.xlu0 %v437, 16
        %v807 = vpop.permute.xlu0 %806
        %808 = vrot.lane.b32.xlu0 %v439, 16
        %v809 = vpop.permute.xlu0 %808
        %842 = vrot.lane.b32.xlu0 %v359, 20
        %v843 = vpop.permute.xlu0 %842
        %844 = vrot.lane.b32.xlu0 %v361, 20
        %v845 = vpop.permute.xlu0 %844
        %846 = vrot.lane.b32.xlu0 %v364, 20
        %v847 = vpop.permute.xlu0 %846
        %848 = vrot.lane.b32.xlu0 %v366, 20
        %v849 = vpop.permute.xlu0 %848
        %850 = vrot.lane.b32.xlu0 %v369, 20
        %v851 = vpop.permute.xlu0 %850
        %852 = vrot.lane.b32.xlu0 %v371, 20
        %v853 = vpop.permute.xlu0 %852
        %854 = vrot.lane.b32.xlu0 %v374, 20
        %v855 = vpop.permute.xlu0 %854
        %856 = vrot.lane.b32.xlu0 %v376, 20
        %v857 = vpop.permute.xlu0 %856
        %858 = vrot.lane.b32.xlu0 %v379, 20
        %v859 = vpop.permute.xlu0 %858
        %860 = vrot.lane.b32.xlu0 %v381, 20
        %v861 = vpop.permute.xlu0 %860
        %862 = vrot.lane.b32.xlu0 %v384, 20
        %v863 = vpop.permute.xlu0 %862
        %864 = vrot.lane.b32.xlu0 %v386, 20
        %v865 = vpop.permute.xlu0 %864
        %866 = vrot.lane.b32.xlu0 %v389, 20
        %v867 = vpop.permute.xlu0 %866
        %868 = vrot.lane.b32.xlu0 %v391, 20
        %v869 = vpop.permute.xlu0 %868
        %870 = vrot.lane.b32.xlu0 %v394, 20
        %v871 = vpop.permute.xlu0 %870
        %872 = vrot.lane.b32.xlu0 %v396, 20
        %v873 = vpop.permute.xlu0 %872
        %874 = vrot.lane.b32.xlu0 %v399, 20
        %v875 = vpop.permute.xlu0 %874
        %876 = vrot.lane.b32.xlu0 %v401, 20
        %v877 = vpop.permute.xlu0 %876
        %878 = vrot.lane.b32.xlu0 %v404, 20
        %v879 = vpop.permute.xlu0 %878
        %880 = vrot.lane.b32.xlu0 %v406, 20
        %v881 = vpop.permute.xlu0 %880
        %882 = vrot.lane.b32.xlu0 %v409, 20
        %v883 = vpop.permute.xlu0 %882
        %884 = vrot.lane.b32.xlu0 %v411, 20
        %v885 = vpop.permute.xlu0 %884
        %886 = vrot.lane.b32.xlu0 %v414, 20
        %v887 = vpop.permute.xlu0 %886
        %888 = vrot.lane.b32.xlu0 %v416, 20
        %v889 = vpop.permute.xlu0 %888
        %890 = vrot.lane.b32.xlu0 %v419, 20
        %v891 = vpop.permute.xlu0 %890
        %892 = vrot.lane.b32.xlu0 %v421, 20
        %v893 = vpop.permute.xlu0 %892
        %894 = vrot.lane.b32.xlu0 %v424, 20
        %v895 = vpop.permute.xlu0 %894
        %896 = vrot.lane.b32.xlu0 %v426, 20
        %v897 = vpop.permute.xlu0 %896
        %898 = vrot.lane.b32.xlu0 %v429, 20
        %v899 = vpop.permute.xlu0 %898
        %900 = vrot.lane.b32.xlu0 %v431, 20
        %v901 = vpop.permute.xlu0 %900
        %902 = vrot.lane.b32.xlu0 %v442, 20
        %v903 = vpop.permute.xlu0 %902
        %904 = vrot.lane.b32.xlu0 %v444, 20
        %v905 = vpop.permute.xlu0 %904
        %938 = vrot.lane.b32.xlu0 %v174, 24
        %v939 = vpop.permute.xlu0 %938
        %940 = vrot.lane.b32.xlu0 %v175, 24
        %v941 = vpop.permute.xlu0 %940
        %942 = vrot.lane.b32.xlu0 %v177, 24
        %v943 = vpop.permute.xlu0 %942
        %944 = vrot.lane.b32.xlu0 %v178, 24
        %v945 = vpop.permute.xlu0 %944
        %946 = vrot.lane.b32.xlu0 %v180, 24
        %v947 = vpop.permute.xlu0 %946
        %948 = vrot.lane.b32.xlu0 %v181, 24
        %v949 = vpop.permute.xlu0 %948
        %950 = vrot.lane.b32.xlu0 %v183, 24
        %v951 = vpop.permute.xlu0 %950
        %952 = vrot.lane.b32.xlu0 %v184, 24
        %v953 = vpop.permute.xlu0 %952
        %954 = vrot.lane.b32.xlu0 %v186, 24
        %v955 = vpop.permute.xlu0 %954
        %956 = vrot.lane.b32.xlu0 %v187, 24
        %v957 = vpop.permute.xlu0 %956
        %958 = vrot.lane.b32.xlu0 %v189, 24
        %v959 = vpop.permute.xlu0 %958
        %960 = vrot.lane.b32.xlu0 %v190, 24
        %v961 = vpop.permute.xlu0 %960
        %962 = vrot.lane.b32.xlu0 %v192, 24
        %v963 = vpop.permute.xlu0 %962
        %964 = vrot.lane.b32.xlu0 %v193, 24
        %v965 = vpop.permute.xlu0 %964
        %966 = vrot.lane.b32.xlu0 %v195, 24
        %v967 = vpop.permute.xlu0 %966
        %968 = vrot.lane.b32.xlu0 %v196, 24
        %v969 = vpop.permute.xlu0 %968
        %970 = vrot.lane.b32.xlu0 %v198, 24
        %v971 = vpop.permute.xlu0 %970
        %972 = vrot.lane.b32.xlu0 %v199, 24
        %v973 = vpop.permute.xlu0 %972
        %974 = vrot.lane.b32.xlu0 %v201, 24
        %v975 = vpop.permute.xlu0 %974
        %976 = vrot.lane.b32.xlu0 %v202, 24
        %v977 = vpop.permute.xlu0 %976
        %978 = vrot.lane.b32.xlu0 %v204, 24
        %v979 = vpop.permute.xlu0 %978
        %980 = vrot.lane.b32.xlu0 %v205, 24
        %v981 = vpop.permute.xlu0 %980
        %982 = vrot.lane.b32.xlu0 %v207, 24
        %v983 = vpop.permute.xlu0 %982
        %984 = vrot.lane.b32.xlu0 %v208, 24
        %v985 = vpop.permute.xlu0 %984
        %986 = vrot.lane.b32.xlu0 %v210, 24
        %v987 = vpop.permute.xlu0 %986
        %988 = vrot.lane.b32.xlu0 %v211, 24
        %v989 = vpop.permute.xlu0 %988
        %990 = vrot.lane.b32.xlu0 %v213, 24
        %v991 = vpop.permute.xlu0 %990
        %992 = vrot.lane.b32.xlu0 %v214, 24
        %v993 = vpop.permute.xlu0 %992
        %994 = vrot.lane.b32.xlu0 %v216, 24
        %v995 = vpop.permute.xlu0 %994
        %996 = vrot.lane.b32.xlu0 %v217, 24
        %v997 = vpop.permute.xlu0 %996
        %998 = vrot.lane.b32.xlu0 %v219, 24
        %v999 = vpop.permute.xlu0 %998
        %1000 = vrot.lane.b32.xlu0 %v220, 24
        %v1001 = vpop.permute.xlu0 %1000
        %1034 = vrot.lane.b32.xlu0 %v283, 28
        %v1035 = vpop.permute.xlu0 %1034
        %1036 = vrot.lane.b32.xlu0 %v285, 28
        %v1037 = vpop.permute.xlu0 %1036
        %1038 = vrot.lane.b32.xlu0 %v288, 28
        %v1039 = vpop.permute.xlu0 %1038
        %1040 = vrot.lane.b32.xlu0 %v290, 28
        %v1041 = vpop.permute.xlu0 %1040
        %1042 = vrot.lane.b32.xlu0 %v293, 28
        %v1043 = vpop.permute.xlu0 %1042
        %1044 = vrot.lane.b32.xlu0 %v295, 28
        %v1045 = vpop.permute.xlu0 %1044
        %1046 = vrot.lane.b32.xlu0 %v298, 28
        %v1047 = vpop.permute.xlu0 %1046
        %1048 = vrot.lane.b32.xlu0 %v300, 28
        %v1049 = vpop.permute.xlu0 %1048
        %1050 = vrot.lane.b32.xlu0 %v303, 28
        %v1051 = vpop.permute.xlu0 %1050
        %1052 = vrot.lane.b32.xlu0 %v305, 28
        %v1053 = vpop.permute.xlu0 %1052
        %1054 = vrot.lane.b32.xlu0 %v308, 28
        %v1055 = vpop.permute.xlu0 %1054
        %1056 = vrot.lane.b32.xlu0 %v310, 28
        %v1057 = vpop.permute.xlu0 %1056
        %1058 = vrot.lane.b32.xlu0 %v313, 28
        %v1059 = vpop.permute.xlu0 %1058
        %1060 = vrot.lane.b32.xlu0 %v315, 28
        %v1061 = vpop.permute.xlu0 %1060
        %1062 = vrot.lane.b32.xlu0 %v318, 28
        %v1063 = vpop.permute.xlu0 %1062
        %1064 = vrot.lane.b32.xlu0 %v320, 28
        %v1065 = vpop.permute.xlu0 %1064
        %1066 = vrot.lane.b32.xlu0 %v323, 28
        %v1067 = vpop.permute.xlu0 %1066
        %1068 = vrot.lane.b32.xlu0 %v325, 28
        %v1069 = vpop.permute.xlu0 %1068
        %1070 = vrot.lane.b32.xlu0 %v328, 28
        %v1071 = vpop.permute.xlu0 %1070
        %1072 = vrot.lane.b32.xlu0 %v330, 28
        %v1073 = vpop.permute.xlu0 %1072
        %1074 = vrot.lane.b32.xlu0 %v333, 28
        %v1075 = vpop.permute.xlu0 %1074
        %1076 = vrot.lane.b32.xlu0 %v335, 28
        %v1077 = vpop.permute.xlu0 %1076
        %1078 = vrot.lane.b32.xlu0 %v338, 28
        %v1079 = vpop.permute.xlu0 %1078
        %1080 = vrot.lane.b32.xlu0 %v340, 28
        %v1081 = vpop.permute.xlu0 %1080
        %1082 = vrot.lane.b32.xlu0 %v343, 28
        %v1083 = vpop.permute.xlu0 %1082
        %1084 = vrot.lane.b32.xlu0 %v345, 28
        %v1085 = vpop.permute.xlu0 %1084
        %1086 = vrot.lane.b32.xlu0 %v348, 28
        %v1087 = vpop.permute.xlu0 %1086
        %1088 = vrot.lane.b32.xlu0 %v350, 28
        %v1089 = vpop.permute.xlu0 %1088
        %1090 = vrot.lane.b32.xlu0 %v437, 28
        %v1091 = vpop.permute.xlu0 %1090
        %1092 = vrot.lane.b32.xlu0 %v439, 28
        %v1093 = vpop.permute.xlu0 %1092
        %1094 = vrot.lane.b32.xlu0 %v450, 28
        %v1095 = vpop.permute.xlu0 %1094
        %1096 = vrot.lane.b32.xlu0 %v452, 28
        %v1097 = vpop.permute.xlu0 %1096
        %1130 = vrot.lane.b32.xlu0 %v364, 32
        %v1131 = vpop.permute.xlu0 %1130
        %1132 = vrot.lane.b32.xlu0 %v366, 32
        %v1133 = vpop.permute.xlu0 %1132
        %1134 = vrot.lane.b32.xlu0 %v369, 32
        %v1135 = vpop.permute.xlu0 %1134
        %1136 = vrot.lane.b32.xlu0 %v371, 32
        %v1137 = vpop.permute.xlu0 %1136
        %1138 = vrot.lane.b32.xlu0 %v374, 32
        %v1139 = vpop.permute.xlu0 %1138
        %1140 = vrot.lane.b32.xlu0 %v376, 32
        %v1141 = vpop.permute.xlu0 %1140
        %1142 = vrot.lane.b32.xlu0 %v379, 32
        %v1143 = vpop.permute.xlu0 %1142
        %1144 = vrot.lane.b32.xlu0 %v381, 32
        %v1145 = vpop.permute.xlu0 %1144
        %1146 = vrot.lane.b32.xlu0 %v384, 32
        %v1147 = vpop.permute.xlu0 %1146
        %1148 = vrot.lane.b32.xlu0 %v386, 32
        %v1149 = vpop.permute.xlu0 %1148
        %1150 = vrot.lane.b32.xlu0 %v389, 32
        %v1151 = vpop.permute.xlu0 %1150
        %1152 = vrot.lane.b32.xlu0 %v391, 32
        %v1153 = vpop.permute.xlu0 %1152
        %1154 = vrot.lane.b32.xlu0 %v394, 32
        %v1155 = vpop.permute.xlu0 %1154
        %1156 = vrot.lane.b32.xlu0 %v396, 32
        %v1157 = vpop.permute.xlu0 %1156
        %1158 = vrot.lane.b32.xlu0 %v399, 32
        %v1159 = vpop.permute.xlu0 %1158
        %1160 = vrot.lane.b32.xlu0 %v401, 32
        %v1161 = vpop.permute.xlu0 %1160
        %1162 = vrot.lane.b32.xlu0 %v404, 32
        %v1163 = vpop.permute.xlu0 %1162
        %1164 = vrot.lane.b32.xlu0 %v406, 32
        %v1165 = vpop.permute.xlu0 %1164
        %1166 = vrot.lane.b32.xlu0 %v409, 32
        %v1167 = vpop.permute.xlu0 %1166
        %1168 = vrot.lane.b32.xlu0 %v411, 32
        %v1169 = vpop.permute.xlu0 %1168
        %1170 = vrot.lane.b32.xlu0 %v414, 32
        %v1171 = vpop.permute.xlu0 %1170
        %1172 = vrot.lane.b32.xlu0 %v416, 32
        %v1173 = vpop.permute.xlu0 %1172
        %1174 = vrot.lane.b32.xlu0 %v419, 32
        %v1175 = vpop.permute.xlu0 %1174
        %1176 = vrot.lane.b32.xlu0 %v421, 32
        %v1177 = vpop.permute.xlu0 %1176
        %1178 = vrot.lane.b32.xlu0 %v424, 32
        %v1179 = vpop.permute.xlu0 %1178
        %1180 = vrot.lane.b32.xlu0 %v426, 32
        %v1181 = vpop.permute.xlu0 %1180
        %1182 = vrot.lane.b32.xlu0 %v429, 32
        %v1183 = vpop.permute.xlu0 %1182
        %1184 = vrot.lane.b32.xlu0 %v431, 32
        %v1185 = vpop.permute.xlu0 %1184
        %1186 = vrot.lane.b32.xlu0 %v442, 32
        %v1187 = vpop.permute.xlu0 %1186
        %1188 = vrot.lane.b32.xlu0 %v444, 32
        %v1189 = vpop.permute.xlu0 %1188
        %1190 = vrot.lane.b32.xlu0 %v455, 32
        %v1191 = vpop.permute.xlu0 %1190
        %1192 = vrot.lane.b32.xlu0 %v457, 32
        %v1193 = vpop.permute.xlu0 %1192
        %vm1226 = vcmask 31744
        %v1227 = vsel %vm1226, %v168, %v459
        %v1228 = vsel %vm1226, %v169, %v461
        %v1229 = vsel %vm1226, %v171, %v463
        %v1230 = vsel %vm1226, %v172, %v465
        %v1231 = vsel %vm1226, %v174, %v467
        %v1232 = vsel %vm1226, %v175, %v469
        %v1233 = vsel %vm1226, %v177, %v471
        %v1234 = vsel %vm1226, %v178, %v473
        %v1235 = vsel %vm1226, %v180, %v475
        %v1236 = vsel %vm1226, %v181, %v477
        %v1237 = vsel %vm1226, %v183, %v479
        %v1238 = vsel %vm1226, %v184, %v481
        %v1239 = vsel %vm1226, %v186, %v483
        %v1240 = vsel %vm1226, %v187, %v485
        %v1241 = vsel %vm1226, %v189, %v487
        %v1242 = vsel %vm1226, %v190, %v489
        %v1243 = vsel %vm1226, %v192, %v491
        %v1244 = vsel %vm1226, %v193, %v493
        %v1245 = vsel %vm1226, %v195, %v495
        %v1246 = vsel %vm1226, %v196, %v497
        %v1247 = vsel %vm1226, %v198, %v499
        %v1248 = vsel %vm1226, %v199, %v501
        %v1249 = vsel %vm1226, %v201, %v503
        %v1250 = vsel %vm1226, %v202, %v505
        %v1251 = vsel %vm1226, %v204, %v507
        %v1252 = vsel %vm1226, %v205, %v509
        %v1253 = vsel %vm1226, %v207, %v511
        %v1254 = vsel %vm1226, %v208, %v513
        %v1255 = vsel %vm1226, %v210, %v515
        %v1256 = vsel %vm1226, %v211, %v517
        %v1257 = vsel %vm1226, %v213, %v519
        %v1258 = vsel %vm1226, %v214, %v521
        %vm1259 = vcmask 64512
        %v1260 = vsel %vm1259, %v1227, %v555
        %v1261 = vsel %vm1259, %v1228, %v557
        %v1262 = vsel %vm1259, %v1229, %v559
        %v1263 = vsel %vm1259, %v1230, %v561
        %v1264 = vsel %vm1259, %v1231, %v563
        %v1265 = vsel %vm1259, %v1232, %v565
        %v1266 = vsel %vm1259, %v1233, %v567
        %v1267 = vsel %vm1259, %v1234, %v569
        %v1268 = vsel %vm1259, %v1235, %v571
        %v1269 = vsel %vm1259, %v1236, %v573
        %v1270 = vsel %vm1259, %v1237, %v575
        %v1271 = vsel %vm1259, %v1238, %v577
        %v1272 = vsel %vm1259, %v1239, %v579
        %v1273 = vsel %vm1259, %v1240, %v581
        %v1274 = vsel %vm1259, %v1241, %v583
        %v1275 = vsel %vm1259, %v1242, %v585
        %v1276 = vsel %vm1259, %v1243, %v587
        %v1277 = vsel %vm1259, %v1244, %v589
        %v1278 = vsel %vm1259, %v1245, %v591
        %v1279 = vsel %vm1259, %v1246, %v593
        %v1280 = vsel %vm1259, %v1247, %v595
        %v1281 = vsel %vm1259, %v1248, %v597
        %v1282 = vsel %vm1259, %v1249, %v599
        %v1283 = vsel %vm1259, %v1250, %v601
        %v1284 = vsel %vm1259, %v1251, %v603
        %v1285 = vsel %vm1259, %v1252, %v605
        %v1286 = vsel %vm1259, %v1253, %v607
        %v1287 = vsel %vm1259, %v1254, %v609
        %v1288 = vsel %vm1259, %v1255, %v611
        %v1289 = vsel %vm1259, %v1256, %v613
        %v1290 = vsel %vm1259, %v1257, %v615
        %v1291 = vsel %vm1259, %v1258, %v617
        %vm1292 = vcmask 97280
        %v1293 = vsel %vm1292, %v1260, %v651
        %v1294 = vsel %vm1292, %v1261, %v653
        %v1295 = vsel %vm1292, %v1262, %v655
        %v1296 = vsel %vm1292, %v1263, %v657
        %v1297 = vsel %vm1292, %v1264, %v659
        %v1298 = vsel %vm1292, %v1265, %v661
        %v1299 = vsel %vm1292, %v1266, %v663
        %v1300 = vsel %vm1292, %v1267, %v665
        %v1301 = vsel %vm1292, %v1268, %v667
        %v1302 = vsel %vm1292, %v1269, %v669
        %v1303 = vsel %vm1292, %v1270, %v671
        %v1304 = vsel %vm1292, %v1271, %v673
        %v1305 = vsel %vm1292, %v1272, %v675
        %v1306 = vsel %vm1292, %v1273, %v677
        %v1307 = vsel %vm1292, %v1274, %v679
        %v1308 = vsel %vm1292, %v1275, %v681
        %v1309 = vsel %vm1292, %v1276, %v683
        %v1310 = vsel %vm1292, %v1277, %v685
        %v1311 = vsel %vm1292, %v1278, %v687
        %v1312 = vsel %vm1292, %v1279, %v689
        %v1313 = vsel %vm1292, %v1280, %v691
        %v1314 = vsel %vm1292, %v1281, %v693
        %v1315 = vsel %vm1292, %v1282, %v695
        %v1316 = vsel %vm1292, %v1283, %v697
        %v1317 = vsel %vm1292, %v1284, %v699
        %v1318 = vsel %vm1292, %v1285, %v701
        %v1319 = vsel %vm1292, %v1286, %v703
        %v1320 = vsel %vm1292, %v1287, %v705
        %v1321 = vsel %vm1292, %v1288, %v707
        %v1322 = vsel %vm1292, %v1289, %v709
        %v1323 = vsel %vm1292, %v1290, %v711
        %v1324 = vsel %vm1292, %v1291, %v713
        %vm1325 = vcmask 130048
        %v1326 = vsel %vm1325, %v1293, %v747
        %v1327 = vsel %vm1325, %v1294, %v749
        %v1328 = vsel %vm1325, %v1295, %v751
        %v1329 = vsel %vm1325, %v1296, %v753
        %v1330 = vsel %vm1325, %v1297, %v755
        %v1331 = vsel %vm1325, %v1298, %v757
        %v1332 = vsel %vm1325, %v1299, %v759
        %v1333 = vsel %vm1325, %v1300, %v761
        %v1334 = vsel %vm1325, %v1301, %v763
        %v1335 = vsel %vm1325, %v1302, %v765
        %v1336 = vsel %vm1325, %v1303, %v767
        %v1337 = vsel %vm1325, %v1304, %v769
        %v1338 = vsel %vm1325, %v1305, %v771
        %v1339 = vsel %vm1325, %v1306, %v773
        %v1340 = vsel %vm1325, %v1307, %v775
        %v1341 = vsel %vm1325, %v1308, %v777
        %v1342 = vsel %vm1325, %v1309, %v779
        %v1343 = vsel %vm1325, %v1310, %v781
        %v1344 = vsel %vm1325, %v1311, %v783
        %v1345 = vsel %vm1325, %v1312, %v785
        %v1346 = vsel %vm1325, %v1313, %v787
        %v1347 = vsel %vm1325, %v1314, %v789
        %v1348 = vsel %vm1325, %v1315, %v791
        %v1349 = vsel %vm1325, %v1316, %v793
        %v1350 = vsel %vm1325, %v1317, %v795
        %v1351 = vsel %vm1325, %v1318, %v797
        %v1352 = vsel %vm1325, %v1319, %v799
        %v1353 = vsel %vm1325, %v1320, %v801
        %v1354 = vsel %vm1325, %v1321, %v803
        %v1355 = vsel %vm1325, %v1322, %v805
        %v1356 = vsel %vm1325, %v1323, %v807
        %v1357 = vsel %vm1325, %v1324, %v809
        %vm1358 = vcmask 162816
        %v1359 = vsel %vm1358, %v1326, %v843
        %v1360 = vsel %vm1358, %v1327, %v845
        %v1361 = vsel %vm1358, %v1328, %v847
        %v1362 = vsel %vm1358, %v1329, %v849
        %v1363 = vsel %vm1358, %v1330, %v851
        %v1364 = vsel %vm1358, %v1331, %v853
        %v1365 = vsel %vm1358, %v1332, %v855
        %v1366 = vsel %vm1358, %v1333, %v857
        %v1367 = vsel %vm1358, %v1334, %v859
        %v1368 = vsel %vm1358, %v1335, %v861
        %v1369 = vsel %vm1358, %v1336, %v863
        %v1370 = vsel %vm1358, %v1337, %v865
        %v1371 = vsel %vm1358, %v1338, %v867
        %v1372 = vsel %vm1358, %v1339, %v869
        %v1373 = vsel %vm1358, %v1340, %v871
        %v1374 = vsel %vm1358, %v1341, %v873
        %v1375 = vsel %vm1358, %v1342, %v875
        %v1376 = vsel %vm1358, %v1343, %v877
        %v1377 = vsel %vm1358, %v1344, %v879
        %v1378 = vsel %vm1358, %v1345, %v881
        %v1379 = vsel %vm1358, %v1346, %v883
        %v1380 = vsel %vm1358, %v1347, %v885
        %v1381 = vsel %vm1358, %v1348, %v887
        %v1382 = vsel %vm1358, %v1349, %v889
        %v1383 = vsel %vm1358, %v1350, %v891
        %v1384 = vsel %vm1358, %v1351, %v893
        %v1385 = vsel %vm1358, %v1352, %v895
        %v1386 = vsel %vm1358, %v1353, %v897
        %v1387 = vsel %vm1358, %v1354, %v899
        %v1388 = vsel %vm1358, %v1355, %v901
        %v1389 = vsel %vm1358, %v1356, %v903
        %v1390 = vsel %vm1358, %v1357, %v905
        %vm1391 = vcmask 195584
        %v1392 = vsel %vm1391, %v1359, %v939
        %v1393 = vsel %vm1391, %v1360, %v941
        %v1394 = vsel %vm1391, %v1361, %v943
        %v1395 = vsel %vm1391, %v1362, %v945
        %v1396 = vsel %vm1391, %v1363, %v947
        %v1397 = vsel %vm1391, %v1364, %v949
        %v1398 = vsel %vm1391, %v1365, %v951
        %v1399 = vsel %vm1391, %v1366, %v953
        %v1400 = vsel %vm1391, %v1367, %v955
        %v1401 = vsel %vm1391, %v1368, %v957
        %v1402 = vsel %vm1391, %v1369, %v959
        %v1403 = vsel %vm1391, %v1370, %v961
        %v1404 = vsel %vm1391, %v1371, %v963
        %v1405 = vsel %vm1391, %v1372, %v965
        %v1406 = vsel %vm1391, %v1373, %v967
        %v1407 = vsel %vm1391, %v1374, %v969
        %v1408 = vsel %vm1391, %v1375, %v971
        %v1409 = vsel %vm1391, %v1376, %v973
        %v1410 = vsel %vm1391, %v1377, %v975
        %v1411 = vsel %vm1391, %v1378, %v977
        %v1412 = vsel %vm1391, %v1379, %v979
        %v1413 = vsel %vm1391, %v1380, %v981
        %v1414 = vsel %vm1391, %v1381, %v983
        %v1415 = vsel %vm1391, %v1382, %v985
        %v1416 = vsel %vm1391, %v1383, %v987
        %v1417 = vsel %vm1391, %v1384, %v989
        %v1418 = vsel %vm1391, %v1385, %v991
        %v1419 = vsel %vm1391, %v1386, %v993
        %v1420 = vsel %vm1391, %v1387, %v995
        %v1421 = vsel %vm1391, %v1388, %v997
        %v1422 = vsel %vm1391, %v1389, %v999
        %v1423 = vsel %vm1391, %v1390, %v1001
        %vm1424 = vcmask 228352
        %v1425 = vsel %vm1424, %v1392, %v1035
        %v1426 = vsel %vm1424, %v1393, %v1037
        %v1427 = vsel %vm1424, %v1394, %v1039
        %v1428 = vsel %vm1424, %v1395, %v1041
        %v1429 = vsel %vm1424, %v1396, %v1043
        %v1430 = vsel %vm1424, %v1397, %v1045
        %v1431 = vsel %vm1424, %v1398, %v1047
        %v1432 = vsel %vm1424, %v1399, %v1049
        %v1433 = vsel %vm1424, %v1400, %v1051
        %v1434 = vsel %vm1424, %v1401, %v1053
        %v1435 = vsel %vm1424, %v1402, %v1055
        %v1436 = vsel %vm1424, %v1403, %v1057
        %v1437 = vsel %vm1424, %v1404, %v1059
        %v1438 = vsel %vm1424, %v1405, %v1061
        %v1439 = vsel %vm1424, %v1406, %v1063
        %v1440 = vsel %vm1424, %v1407, %v1065
        %v1441 = vsel %vm1424, %v1408, %v1067
        %v1442 = vsel %vm1424, %v1409, %v1069
        %v1443 = vsel %vm1424, %v1410, %v1071
        %v1444 = vsel %vm1424, %v1411, %v1073
        %v1445 = vsel %vm1424, %v1412, %v1075
        %v1446 = vsel %vm1424, %v1413, %v1077
        %v1447 = vsel %vm1424, %v1414, %v1079
        %v1448 = vsel %vm1424, %v1415, %v1081
        %v1449 = vsel %vm1424, %v1416, %v1083
        %v1450 = vsel %vm1424, %v1417, %v1085
        %v1451 = vsel %vm1424, %v1418, %v1087
        %v1452 = vsel %vm1424, %v1419, %v1089
        %v1453 = vsel %vm1424, %v1420, %v1091
        %v1454 = vsel %vm1424, %v1421, %v1093
        %v1455 = vsel %vm1424, %v1422, %v1095
        %v1456 = vsel %vm1424, %v1423, %v1097
        %vm1457 = vcmask 261120
        %v1458 = vsel %vm1457, %v1425, %v1131
        %v1459 = vsel %vm1457, %v1426, %v1133
        %v1460 = vsel %vm1457, %v1427, %v1135
        %v1461 = vsel %vm1457, %v1428, %v1137
        %v1462 = vsel %vm1457, %v1429, %v1139
        %v1463 = vsel %vm1457, %v1430, %v1141
        %v1464 = vsel %vm1457, %v1431, %v1143
        %v1465 = vsel %vm1457, %v1432, %v1145
        %v1466 = vsel %vm1457, %v1433, %v1147
        %v1467 = vsel %vm1457, %v1434, %v1149
        %v1468 = vsel %vm1457, %v1435, %v1151
        %v1469 = vsel %vm1457, %v1436, %v1153
        %v1470 = vsel %vm1457, %v1437, %v1155
        %v1471 = vsel %vm1457, %v1438, %v1157
        %v1472 = vsel %vm1457, %v1439, %v1159
        %v1473 = vsel %vm1457, %v1440, %v1161
        %v1474 = vsel %vm1457, %v1441, %v1163
        %v1475 = vsel %vm1457, %v1442, %v1165
        %v1476 = vsel %vm1457, %v1443, %v1167
        %v1477 = vsel %vm1457, %v1444, %v1169
        %v1478 = vsel %vm1457, %v1445, %v1171
        %v1479 = vsel %vm1457, %v1446, %v1173
        %v1480 = vsel %vm1457, %v1447, %v1175
        %v1481 = vsel %vm1457, %v1448, %v1177
        %v1482 = vsel %vm1457, %v1449, %v1179
        %v1483 = vsel %vm1457, %v1450, %v1181
        %v1484 = vsel %vm1457, %v1451, %v1183
        %v1485 = vsel %vm1457, %v1452, %v1185
        %v1486 = vsel %vm1457, %v1453, %v1187
        %v1487 = vsel %vm1457, %v1454, %v1189
        %v1488 = vsel %vm1457, %v1455, %v1191
        %v1489 = vsel %vm1457, %v1456, %v1193
        %vm1490 = vcmask 293888
        %v1491 = vsel %vm1490, %v1458, 0.0
        %v1492 = vsel %vm1490, %v1459, 0.0
        %v1493 = vsel %vm1490, %v1460, 0.0
        %v1494 = vsel %vm1490, %v1461, 0.0
        %v1495 = vsel %vm1490, %v1462, 0.0
        %v1496 = vsel %vm1490, %v1463, 0.0
        %v1497 = vsel %vm1490, %v1464, 0.0
        %v1498 = vsel %vm1490, %v1465, 0.0
        %v1499 = vsel %vm1490, %v1466, 0.0
        %v1500 = vsel %vm1490, %v1467, 0.0
        %v1501 = vsel %vm1490, %v1468, 0.0
        %v1502 = vsel %vm1490, %v1469, 0.0
        %v1503 = vsel %vm1490, %v1470, 0.0
        %v1504 = vsel %vm1490, %v1471, 0.0
        %v1505 = vsel %vm1490, %v1472, 0.0
        %v1506 = vsel %vm1490, %v1473, 0.0
        %v1507 = vsel %vm1490, %v1474, 0.0
        %v1508 = vsel %vm1490, %v1475, 0.0
        %v1509 = vsel %vm1490, %v1476, 0.0
        %v1510 = vsel %vm1490, %v1477, 0.0
        %v1511 = vsel %vm1490, %v1478, 0.0
        %v1512 = vsel %vm1490, %v1479, 0.0
        %v1513 = vsel %vm1490, %v1480, 0.0
        %v1514 = vsel %vm1490, %v1481, 0.0
        %v1515 = vsel %vm1490, %v1482, 0.0
        %v1516 = vsel %vm1490, %v1483, 0.0
        %v1517 = vsel %vm1490, %v1484, 0.0
        %v1518 = vsel %vm1490, %v1485, 0.0
        %v1519 = vsel %vm1490, %v1486, 0.0
        %v1520 = vsel %vm1490, %v1487, 0.0
        %v1521 = vsel %vm1490, %v1488, 0.0
        %v1522 = vsel %vm1490, %v1489, 0.0
        %v1523 = vpack.c.bf16 %v1492, %v1491
        %v1524 = vpack.c.bf16 %v1494, %v1493
        %v1525 = vpack.c.bf16 %v1496, %v1495
        %v1526 = vpack.c.bf16 %v1498, %v1497
        %v1527 = vpack.c.bf16 %v1500, %v1499
        %v1528 = vpack.c.bf16 %v1502, %v1501
        %v1529 = vpack.c.bf16 %v1504, %v1503
        %v1530 = vpack.c.bf16 %v1506, %v1505
        %v1531 = vpack.c.bf16 %v1508, %v1507
        %v1532 = vpack.c.bf16 %v1510, %v1509
        %v1533 = vpack.c.bf16 %v1512, %v1511
        %v1534 = vpack.c.bf16 %v1514, %v1513
        %v1535 = vpack.c.bf16 %v1516, %v1515
        %v1536 = vpack.c.bf16 %v1518, %v1517
        %v1537 = vpack.c.bf16 %v1520, %v1519
        %v1538 = vpack.c.bf16 %v1522, %v1521
        %v1539 = vld [vmem:[%s1] sm:$0xf]
        %v1540 = vld [vmem:[%s1 + $0x4] sm:$0xf]
        %v1541 = vld [vmem:[%s1 + $0x8] sm:$0xf]
        %v1542 = vld [vmem:[%s1 + $0xc] sm:$0xf]
        %v1543 = vld [vmem:[%s1 + $0x10] sm:$0xf]
        %v1544 = vld [vmem:[%s1 + $0x14] sm:$0xf]
        %v1545 = vld [vmem:[%s1 + $0x18] sm:$0xf]
        %v1546 = vld [vmem:[%s1 + $0x1c] sm:$0xf]
        %v1547 = vld [vmem:[%s1 + $0x20] sm:$0xf]
        %v1548 = vld [vmem:[%s1 + $0x24] sm:$0xf]
        %v1549 = vld [vmem:[%s1 + $0x28] sm:$0xf]
        %v1550 = vld [vmem:[%s1 + $0x2c] sm:$0xf]
        %v1551 = vld [vmem:[%s1 + $0x30] sm:$0xf]
        %v1552 = vld [vmem:[%s1 + $0x34] sm:$0xf]
        %v1553 = vld [vmem:[%s1 + $0x38] sm:$0xf]
        %v1554 = vld [vmem:[%s1 + $0x3c] sm:$0xf]
        %v1571 = vunpack.c.l.b16 %v1539
        %v1572 = vunpack.c.l.b16 %v1540
        %v1573 = vunpack.c.l.b16 %v1541
        %v1574 = vunpack.c.l.b16 %v1542
        %v1575 = vunpack.c.l.b16 %v1543
        %v1576 = vunpack.c.l.b16 %v1544
        %v1577 = vunpack.c.l.b16 %v1545
        %v1578 = vunpack.c.l.b16 %v1546
        %v1579 = vunpack.c.l.b16 %v1547
        %v1580 = vunpack.c.l.b16 %v1548
        %v1581 = vunpack.c.l.b16 %v1549
        %v1582 = vunpack.c.l.b16 %v1550
        %v1583 = vunpack.c.l.b16 %v1551
        %v1584 = vunpack.c.l.b16 %v1552
        %v1585 = vunpack.c.l.b16 %v1553
        %v1586 = vunpack.c.l.b16 %v1554
        %v1587 = vpack.c.b16 %v1572, %v1571
        %v1588 = vpack.c.b16 %v1574, %v1573
        %v1589 = vpack.c.b16 %v1576, %v1575
        %v1590 = vpack.c.b16 %v1578, %v1577
        %v1591 = vpack.c.b16 %v1580, %v1579
        %v1592 = vpack.c.b16 %v1582, %v1581
        %v1593 = vpack.c.b16 %v1584, %v1583
        %v1594 = vpack.c.b16 %v1586, %v1585
        %1603 = vmatpush.bf16.msra.mxu0 %v1594
        %1604 = vmatpush.bf16.msra.mxu0 %v1593
        %1605 = vmatpush.bf16.msra.mxu0 %v1592
        %1606 = vmatpush.bf16.msra.mxu0 %v1591
        %1607 = vmatpush.bf16.msra.mxu0 %v1590
        %1608 = vmatpush.bf16.msra.mxu0 %v1589
        %1609 = vmatpush.bf16.msra.mxu0 %v1588
        %1610 = vmatpush.bf16.msra.mxu0 %v1587
        %1611 = vmatmul.bf16.gmra.mxu0 %v1523
        %v1612 = vpop.f32.mrf.mxu0
        %v1613 = vadd.f32 0.0, %v1612
        %v1614 = vpop.f32.mrf.mxu0
        %v1615 = vadd.f32 0.0, %v1614
        %1616 = vmatmul.bf16.gmra.mxu0 %v1524
        %v1617 = vpop.f32.mrf.mxu0
        %v1618 = vadd.f32 0.0, %v1617
        %v1619 = vpop.f32.mrf.mxu0
        %v1620 = vadd.f32 0.0, %v1619
        %1621 = vmatmul.bf16.gmra.mxu0 %v1525
        %v1622 = vpop.f32.mrf.mxu0
        %v1623 = vadd.f32 0.0, %v1622
        %v1624 = vpop.f32.mrf.mxu0
        %v1625 = vadd.f32 0.0, %v1624
        %1626 = vmatmul.bf16.gmra.mxu0 %v1526
        %v1627 = vpop.f32.mrf.mxu0
        %v1628 = vadd.f32 0.0, %v1627
        %v1629 = vpop.f32.mrf.mxu0
        %v1630 = vadd.f32 0.0, %v1629
        %1631 = vmatmul.bf16.gmra.mxu0 %v1527
        %v1632 = vpop.f32.mrf.mxu0
        %v1633 = vadd.f32 0.0, %v1632
        %v1634 = vpop.f32.mrf.mxu0
        %v1635 = vadd.f32 0.0, %v1634
        %1636 = vmatmul.bf16.gmra.mxu0 %v1528
        %v1637 = vpop.f32.mrf.mxu0
        %v1638 = vadd.f32 0.0, %v1637
        %v1639 = vpop.f32.mrf.mxu0
        %v1640 = vadd.f32 0.0, %v1639
        %1641 = vmatmul.bf16.gmra.mxu0 %v1529
        %v1642 = vpop.f32.mrf.mxu0
        %v1643 = vadd.f32 0.0, %v1642
        %v1644 = vpop.f32.mrf.mxu0
        %v1645 = vadd.f32 0.0, %v1644
        %1646 = vmatmul.bf16.gmra.mxu0 %v1530
        %v1647 = vpop.f32.mrf.mxu0
        %v1648 = vadd.f32 0.0, %v1647
        %v1649 = vpop.f32.mrf.mxu0
        %v1650 = vadd.f32 0.0, %v1649
        %1651 = vmatmul.bf16.gmra.mxu0 %v1531
        %v1652 = vpop.f32.mrf.mxu0
        %v1653 = vadd.f32 0.0, %v1652
        %v1654 = vpop.f32.mrf.mxu0
        %v1655 = vadd.f32 0.0, %v1654
        %1656 = vmatmul.bf16.gmra.mxu0 %v1532
        %v1657 = vpop.f32.mrf.mxu0
        %v1658 = vadd.f32 0.0, %v1657
        %v1659 = vpop.f32.mrf.mxu0
        %v1660 = vadd.f32 0.0, %v1659
        %1661 = vmatmul.bf16.gmra.mxu0 %v1533
        %v1662 = vpop.f32.mrf.mxu0
        %v1663 = vadd.f32 0.0, %v1662
        %v1664 = vpop.f32.mrf.mxu0
        %v1665 = vadd.f32 0.0, %v1664
        %1666 = vmatmul.bf16.gmra.mxu0 %v1534
        %v1667 = vpop.f32.mrf.mxu0
        %v1668 = vadd.f32 0.0, %v1667
        %v1669 = vpop.f32.mrf.mxu0
        %v1670 = vadd.f32 0.0, %v1669
        %1671 = vmatmul.bf16.gmra.mxu0 %v1535
        %v1672 = vpop.f32.mrf.mxu0
        %v1673 = vadd.f32 0.0, %v1672
        %v1674 = vpop.f32.mrf.mxu0
        %v1675 = vadd.f32 0.0, %v1674
        %1676 = vmatmul.bf16.gmra.mxu0 %v1536
        %v1677 = vpop.f32.mrf.mxu0
        %v1678 = vadd.f32 0.0, %v1677
        %v1679 = vpop.f32.mrf.mxu0
        %v1680 = vadd.f32 0.0, %v1679
        %1681 = vmatmul.bf16.gmra.mxu0 %v1537
        %v1682 = vpop.f32.mrf.mxu0
        %v1683 = vadd.f32 0.0, %v1682
        %v1684 = vpop.f32.mrf.mxu0
        %v1685 = vadd.f32 0.0, %v1684
        %1686 = vmatmul.bf16.gmra.mxu0 %v1538
        %v1687 = vpop.f32.mrf.mxu0
        %v1688 = vadd.f32 0.0, %v1687
        %v1689 = vpop.f32.mrf.mxu0
        %v1690 = vadd.f32 0.0, %v1689
        %1691 = vdwg.mxu0
        %1692 = vst [vmem:[%s160] sm:$0xff] %v1613
        %1693 = vst [vmem:[%s160 + $0x8] sm:$0xff] %v1615
        %1694 = vst [vmem:[%s160 + $0x10] sm:$0xff] %v1618
        %1695 = vst [vmem:[%s160 + $0x18] sm:$0xff] %v1620
        %1696 = vst [vmem:[%s160 + $0x20] sm:$0xff] %v1623
        %1697 = vst [vmem:[%s160 + $0x28] sm:$0xff] %v1625
        %1698 = vst [vmem:[%s160 + $0x30] sm:$0xff] %v1628
        %1699 = vst [vmem:[%s160 + $0x38] sm:$0xff] %v1630
        %1700 = vst [vmem:[%s160 + $0x40] sm:$0xff] %v1633
        %1701 = vst [vmem:[%s160 + $0x48] sm:$0xff] %v1635
        %1702 = vst [vmem:[%s160 + $0x50] sm:$0xff] %v1638
        %1703 = vst [vmem:[%s160 + $0x58] sm:$0xff] %v1640
        %1704 = vst [vmem:[%s160 + $0x60] sm:$0xff] %v1643
        %1705 = vst [vmem:[%s160 + $0x68] sm:$0xff] %v1645
        %1706 = vst [vmem:[%s160 + $0x70] sm:$0xff] %v1648
        %1707 = vst [vmem:[%s160 + $0x78] sm:$0xff] %v1650
        %1708 = vst [vmem:[%s160 + $0x80] sm:$0xff] %v1653
        %1709 = vst [vmem:[%s160 + $0x88] sm:$0xff] %v1655
        %1710 = vst [vmem:[%s160 + $0x90] sm:$0xff] %v1658
        %1711 = vst [vmem:[%s160 + $0x98] sm:$0xff] %v1660
        %1712 = vst [vmem:[%s160 + $0xa0] sm:$0xff] %v1663
        %1713 = vst [vmem:[%s160 + $0xa8] sm:$0xff] %v1665
        %1714 = vst [vmem:[%s160 + $0xb0] sm:$0xff] %v1668
        %1715 = vst [vmem:[%s160 + $0xb8] sm:$0xff] %v1670
        %1716 = vst [vmem:[%s160 + $0xc0] sm:$0xff] %v1673
        %1717 = vst [vmem:[%s160 + $0xc8] sm:$0xff] %v1675
        %1718 = vst [vmem:[%s160 + $0xd0] sm:$0xff] %v1678
        %1719 = vst [vmem:[%s160 + $0xd8] sm:$0xff] %v1680
        %1720 = vst [vmem:[%s160 + $0xe0] sm:$0xff] %v1683
        %1721 = vst [vmem:[%s160 + $0xe8] sm:$0xff] %v1685
        %1722 = vst [vmem:[%s160 + $0xf0] sm:$0xff] %v1688
        %1723 = vst [vmem:[%s160 + $0xf8] sm:$0xff] %v1690
        %p1724 = scmp.eq.s32.totalorder %s19, 0
        // Predicated region
        $region29: #{tpu_custom_call.1} parent=27 // pred_check
          %p1725 = pneg %p1724
        $region30: #{tpu_custom_call.1} parent=27 // pred_check_branch
          %1727 = sbr.rel (%p1725) target = $region32
        $region31: #{tpu_custom_call.1} parent=27 // pred_region
          %v1728 = vlaneseq
          %vm1729 = vcmp.ge.s32.totalorder %v1728, 0
          %vm1730 = vcmp.lt.s32.totalorder %v1728, 256
          %vm1731 = vmand %vm1729, %vm1730
          %1732 = vst.msk [vmem:[#allocation4] sm:$0x3] %vm1731, 0.0
        $region32: #{tpu_custom_call.1} parent=27 // pred_fallthru
          _
        %v1733 = vld [vmem:[#allocation4] sm:$0x3]
        %v1734 = vmul.f32 %v1613, %v1613
        %v1735 = vmul.f32 %v1615, %v1615
        %v1736 = vmul.f32 %v1618, %v1618
        %v1737 = vmul.f32 %v1620, %v1620
        %v1738 = vmul.f32 %v1623, %v1623
        %v1739 = vmul.f32 %v1625, %v1625
        %v1740 = vmul.f32 %v1628, %v1628
        %v1741 = vmul.f32 %v1630, %v1630
        %v1742 = vmul.f32 %v1633, %v1633
        %v1743 = vmul.f32 %v1635, %v1635
        %v1744 = vmul.f32 %v1638, %v1638
        %v1745 = vmul.f32 %v1640, %v1640
        %v1746 = vmul.f32 %v1643, %v1643
        %v1747 = vmul.f32 %v1645, %v1645
        %v1748 = vmul.f32 %v1648, %v1648
        %v1749 = vmul.f32 %v1650, %v1650
        %v1750 = vmul.f32 %v1653, %v1653
        %v1751 = vmul.f32 %v1655, %v1655
        %v1752 = vmul.f32 %v1658, %v1658
        %v1753 = vmul.f32 %v1660, %v1660
        %v1754 = vmul.f32 %v1663, %v1663
        %v1755 = vmul.f32 %v1665, %v1665
        %v1756 = vmul.f32 %v1668, %v1668
        %v1757 = vmul.f32 %v1670, %v1670
        %v1758 = vmul.f32 %v1673, %v1673
        %v1759 = vmul.f32 %v1675, %v1675
        %v1760 = vmul.f32 %v1678, %v1678
        %v1761 = vmul.f32 %v1680, %v1680
        %v1762 = vmul.f32 %v1683, %v1683
        %v1763 = vmul.f32 %v1685, %v1685
        %v1764 = vmul.f32 %v1688, %v1688
        %v1765 = vmul.f32 %v1690, %v1690
        %1766 = vmatpush.msra.mxu0 %v1650
        %1767 = vmatpush.msra.mxu0 %v1648
        %1768 = vmatpush.msra.mxu0 %v1645
        %1769 = vmatpush.msra.mxu0 %v1643
        %1770 = vmatpush.msra.mxu0 %v1640
        %1771 = vmatpush.msra.mxu0 %v1638
        %1772 = vmatpush.msra.mxu0 %v1635
        %1773 = vmatpush.msra.mxu0 %v1633
        %1774 = vmatpush.msra.mxu0 %v1630
        %1775 = vmatpush.msra.mxu0 %v1628
        %1776 = vmatpush.msra.mxu0 %v1625
        %1777 = vmatpush.msra.mxu0 %v1623
        %1778 = vmatpush.msra.mxu0 %v1620
        %1779 = vmatpush.msra.mxu0 %v1618
        %1780 = vmatpush.msra.mxu0 %v1615
        %1781 = vmatpush.msra.mxu0 %v1613
        %1782 = vmatmul.f32.gmra.mxu0 1.0
        %v1783 = vpop.f32.mrf.mxu0
        %v1784 = vadd.f32 0.0, %v1783
        %1785 = vdwg.mxu0
        %1786 = vmatpush.msra.mxu0 %v1690
        %1787 = vmatpush.msra.mxu0 %v1688
        %1788 = vmatpush.msra.mxu0 %v1685
        %1789 = vmatpush.msra.mxu0 %v1683
        %1790 = vmatpush.msra.mxu0 %v1680
        %1791 = vmatpush.msra.mxu0 %v1678
        %1792 = vmatpush.msra.mxu0 %v1675
        %1793 = vmatpush.msra.mxu0 %v1673
        %1794 = vmatpush.msra.mxu0 %v1670
        %1795 = vmatpush.msra.mxu0 %v1668
        %1796 = vmatpush.msra.mxu0 %v1665
        %1797 = vmatpush.msra.mxu0 %v1663
        %1798 = vmatpush.msra.mxu0 %v1660
        %1799 = vmatpush.msra.mxu0 %v1658
        %1800 = vmatpush.msra.mxu0 %v1655
        %1801 = vmatpush.msra.mxu0 %v1653
        %1802 = vmatmul.f32.gmra.mxu0 1.0
        %v1803 = vpop.f32.mrf.mxu0
        %v1804 = vadd.f32 %v1784, %v1803
        %1805 = vdwg.mxu0
        %1806 = vmatpush.msra.mxu0 %v1749
        %1807 = vmatpush.msra.mxu0 %v1748
        %1808 = vmatpush.msra.mxu0 %v1747
        %1809 = vmatpush.msra.mxu0 %v1746
        %1810 = vmatpush.msra.mxu0 %v1745
        %1811 = vmatpush.msra.mxu0 %v1744
        %1812 = vmatpush.msra.mxu0 %v1743
        %1813 = vmatpush.msra.mxu0 %v1742
        %1814 = vmatpush.msra.mxu0 %v1741
        %1815 = vmatpush.msra.mxu0 %v1740
        %1816 = vmatpush.msra.mxu0 %v1739
        %1817 = vmatpush.msra.mxu0 %v1738
        %1818 = vmatpush.msra.mxu0 %v1737
        %1819 = vmatpush.msra.mxu0 %v1736
        %1820 = vmatpush.msra.mxu0 %v1735
        %1821 = vmatpush.msra.mxu0 %v1734
        %1822 = vmatmul.f32.gmra.mxu0 1.0
        %v1823 = vpop.f32.mrf.mxu0
        %v1824 = vadd.f32 0.0, %v1823
        %1825 = vdwg.mxu0
        %1826 = vmatpush.msra.mxu0 %v1765
        %1827 = vmatpush.msra.mxu0 %v1764
        %1828 = vmatpush.msra.mxu0 %v1763
        %1829 = vmatpush.msra.mxu0 %v1762
        %1830 = vmatpush.msra.mxu0 %v1761
        %1831 = vmatpush.msra.mxu0 %v1760
        %1832 = vmatpush.msra.mxu0 %v1759
        %1833 = vmatpush.msra.mxu0 %v1758
        %1834 = vmatpush.msra.mxu0 %v1757
        %1835 = vmatpush.msra.mxu0 %v1756
        %1836 = vmatpush.msra.mxu0 %v1755
        %1837 = vmatpush.msra.mxu0 %v1754
        %1838 = vmatpush.msra.mxu0 %v1753
        %1839 = vmatpush.msra.mxu0 %v1752
        %1840 = vmatpush.msra.mxu0 %v1751
        %1841 = vmatpush.msra.mxu0 %v1750
        %1842 = vmatmul.f32.gmra.mxu0 1.0
        %v1843 = vpop.f32.mrf.mxu0
        %v1844 = vadd.f32 %v1824, %v1843
        %1845 = vdwg.mxu0
        %v1848 = vrot.slane %v1844, 7
        %vm1849 = vcmask 1040384
        %v1850 = vsel %vm1849, %v1804, %v1848
        %v1852 = vadd.f32 %v1733, %v1850
        %v1853 = vlaneseq
        %vm1854 = vcmp.ge.s32.totalorder %v1853, 0
        %vm1855 = vcmp.lt.s32.totalorder %v1853, 256
        %vm1856 = vmand %vm1854, %vm1855
        %1857 = vst.msk [vmem:[#allocation4] sm:$0x3] %vm1856, %v1852
        %s1858 = sand.u32 %s74, 1
        %s1859 = scalar_lea.sflag [#allocation3], %s1858
        %s1860 = sand.u32 %s74, 1
        %s1861 = smul.addr %s1860, 256
        %s1862 = scalar_lea.vmem [#allocation2], %s1861
        // Predicated region
        $region33: #{tpu_custom_call.1} parent=27 // pred_check
          %p1863 = pneg %p84
        $region34: #{tpu_custom_call.1} parent=27 // pred_check_branch
          %1865 = sbr.rel (%p1863) target = $region36
        $region35: #{tpu_custom_call.1} parent=27 // pred_region
          %1867 = vsyncadd %s1859, 0
          %s1868 = smul.addr %s19, 32
          %s1869 = smul.addr %s1868, 8
          %s1870 = scalar_lea.hbm %s2, %s1869
          %s1871 = sshll.u32 %s1862, 4
          %s1872 = int_to_ptr.vmem [resolvable:$true] %s1871
          %s1873 = sshll.u32 %s1870, 4
          %s1874 = int_to_ptr.hbm [resolvable:$true] %s1873
          %1879 = dma.vmem_to_hbm [thread:$0]  %s1872, 4096, %s1874, %s1859, 128, 128, 8
        $region36: #{tpu_custom_call.1} parent=27 // pred_fallthru
          _
        // Predicated region
        $region37: #{tpu_custom_call.1} parent=27 // pred_check
          %p1880 = pneg %p105
        $region38: #{tpu_custom_call.1} parent=27 // pred_check_branch
          %1882 = sbr.rel (%p1880) target = $region40
        $region39: #{tpu_custom_call.1} parent=27 // pred_region
          %1884 = vsyncadd [#allocation5], 0
          %s1886 = sshll.u32 [#allocation4], 4
          %s1887 = int_to_ptr.vmem [resolvable:$true] %s1886
          %s1888 = sshll.u32 %s3, 4
          %s1889 = int_to_ptr.hbm [resolvable:$true] %s1888
          %1891 = dma.vmem_to_hbm [thread:$0]  %s1887, 32, %s1889, [#allocation5]
        $region40: #{tpu_custom_call.1} parent=27 // pred_fallthru
          _
        // Predicated region
        $region41: #{tpu_custom_call.1} parent=27 // pred_check
          %p1892 = pneg %p105
        $region42: #{tpu_custom_call.1} parent=27 // pred_check_branch
          %1894 = sbr.rel (%p1892) target = $region44
        $region43: #{tpu_custom_call.1} parent=27 // pred_region
          %1896 = dma.done [#allocation5], 32
        $region44: #{tpu_custom_call.1} parent=27 // pred_fallthru
          _
      $region28: #{tpu_custom_call.1} parent=5 // pred_fallthru
        _
      %p1897 = scmp.le.s32.totalorder 2, %s14
      // Predicated region
      $region45: #{tpu_custom_call.1} parent=5 // pred_check
        %p1898 = pneg %p1897
      $region46: #{tpu_custom_call.1} parent=5 // pred_check_branch
        %1900 = sbr.rel (%p1898) target = $region48
      $region47: #{tpu_custom_call.1} parent=5 // pred_region
        %s1901 = ssub.s32 %s14, 2
        // Predicated region
        $region49: #{tpu_custom_call.1} parent=47 // pred_check
          %p1902 = pneg %p90
        $region50: #{tpu_custom_call.1} parent=47 // pred_check_branch
          %1904 = sbr.rel (%p1902) target = $region52
        $region51: #{tpu_custom_call.1} parent=47 // pred_region
          %s1905 = sand.u32 %s75, 1
          %s1906 = scalar_lea.sflag [#allocation3], %s1905
          %s1907 = sand.u32 %s75, 1
          %s1908 = smul.addr %s1907, 256
          %s1909 = scalar_lea.vmem [#allocation2], %s1908
          %1911 = dma.done %s1906, 4096
        $region52: #{tpu_custom_call.1} parent=47 // pred_fallthru
          _
      $region48: #{tpu_custom_call.1} parent=5 // pred_fallthru
        _
    $region6: #{tpu_custom_call.1} parent=1 // loop_footer
      %s18 = sadd.s32 1, %s14
    $region7: #{tpu_custom_call.1} parent=1 // loop_footer_branch
      %13 = sbr.rel target = $region3
    $region8: #{tpu_custom_call.1} parent=1 // loop_exit
      _
    %1912 = vsyncpa [#allocation3], 1
    %s1913 = scalar_lea.sflag [#allocation3], 1
    %1914 = vsyncpa %s1913, 1
    %1915 = vsyncpa [#allocation5], 1

</llo_original>
